<compile_context>
chip_gen: v7x
topology: tpu7x:2x2x1
jax: 0.10.0
libtpu: 0.0.40
codegen_flags: <defaults>
</compile_context>

<pallas_src>
import numpy as np
import jax
import jax.numpy as jnp
from jax.experimental import pallas as pl
from jax.experimental.pallas import tpu as pltpu

# ----------------------------- static dimensions -----------------------------
B = 2                     # real batch size
BP = 8                    # batch padded to a full sublane group
H = W = 16                # spatial size of obs
CIN = 2                   # actor input channels (obs, tiled state); critic ch1 == 0
C1 = 8                    # conv1 output channels
C2 = 16                   # conv2 output channels
W2 = 8                    # conv2 output width  (stride 2)
H2 = 8                    # conv2 output height (stride 2, via even-row selection)
NH = 128                  # hidden width == packed output lane width
N_A = 5                   # action components (p, dx, dy, dz, dtheta)
HB = H * BP               # conv GEMM rows (= 128)
K1 = 3 * W * CIN          # conv1 merged contraction (96, padded to 128)
K2 = 3 * W * C1           # conv2 merged contraction (384)
K3 = H2 * W2 * C2         # fc1 contraction (1024)
LOG2PI = float(np.log(2.0 * np.pi))

# action ranges matching the torch module defaults
_DXV = 0.005
_DRV = np.pi / 16.0
_LO = np.array([0.0, -_DXV, -_DXV, -_DXV, -_DRV], np.float32)
_HI = np.array([1.0, _DXV, _DXV, _DXV, _DRV], np.float32)


# ------------------------------- Pallas kernel -------------------------------
def _evaluate_kernel(x_ref, m1_ref, m2_ref, w1_ref, w2_ref, bias_ref,
                     act_ref, hc_ref, out_ref):
    """One grid step == one network: program 0 = actor + Gaussian head,
    program 1 = critic.  Activations are (rows=(y, b), lanes=(x, c)) matrices;
    each layer is a single MXU dot with all taps folded into K."""
    bias = bias_ref[0]                               # (8, 128) f32; rows 0..3 used

    # ---- conv1: 3x3, s1, p1 — all 3 ky taps pre-folded into K (lanes=(ky,x,c))
    h1 = jnp.dot(x_ref[0], m1_ref[0], preferred_element_type=jnp.float32)
    h1 = jnp.maximum(h1 + bias[0:1, :], 0.0)         # (HB, W*C1) = (128, 128)

    # ---- conv2: 3x3, s2, p1 — lane-concat the three y-shifted windows (aligned
    #      8-row slices / zero rows) into one (128, 384) LHS, single K=384 dot.
    zrow = jnp.zeros((BP, W * C1), jnp.float32)
    up = jnp.concatenate([zrow, h1[:HB - BP, :]], axis=0)      # input row y-1 (ky=0)
    dn = jnp.concatenate([h1[BP:, :], zrow], axis=0)           # input row y+1 (ky=2)
    lhs2 = jnp.concatenate([up, h1, dn], axis=1).astype(jnp.bfloat16)   # (128, 384)
    h2 = jnp.dot(lhs2, m2_ref[0], preferred_element_type=jnp.float32)
    h2 = jnp.maximum(h2 + bias[1:2, :], 0.0)         # (128, 128)

    # ---- fc1 (1024 -> 128): lane-concat the 8 even y row-groups -> (8, 1024),
    #      one dot (y-stride-2 realized here by consuming only even rows).
    lhs3 = jnp.concatenate(
        [h2[(2 * yo) * BP:(2 * yo) * BP + BP, :] for yo in range(H2)],
        axis=1).astype(jnp.bfloat16)                 # (8, 1024)
    hf = jnp.dot(lhs3, w1_ref[0], preferred_element_type=jnp.float32)
    hf = jnp.maximum(hf + bias[2:3, :], 0.0)         # (8, 128)

    # ---- fc2, zero-padded to 128 output lanes (lane-dense epilogue + store)
    y = jnp.dot(hf.astype(jnp.bfloat16), w2_ref[0],
                preferred_element_type=jnp.float32) + bias[3:4, :]   # (8, 128)

    @pl.when(pl.program_id(0) == 0)
    def _actor_head():
        # hc rows: 0 = -0.5*exp(-2*logstd)  (0 on padded lanes)
        #          1 = -logstd - 0.5*log(2pi)  (0 on padded lanes)
        #          2 = decodeActions scale, 3 = decodeActions shift (+entropy in lane 6)
        #          4 = one-hot lane N_A selector for the log_prob sum
        hc = hc_ref[...]                             # (8, 128)
        a = act_ref[...]                             # (8, 128), lanes >= N_A are 0
        diff = a - y
        lp = diff * diff * hc[0:1, :] + hc[1:2, :]   # padded lanes contribute exactly 0
        lp_sum = jnp.sum(lp, axis=1, keepdims=True)  # (8, 1)
        # lanes 0..4 scaled actions, lane 5 log_prob sum, lane 6 entropy sum
        out_ref[0] = a * hc[2:3, :] + hc[3:4, :] + lp_sum * hc[4:5, :]

    @pl.when(pl.program_id(0) == 1)
    def _critic_value():
        out_ref[0] = y                               # value in lane 0


# -------------------------- parameter preparation ----------------------------
def _banded(w, w_in, w_out, stride):
    """Fold a 3x3 conv weight (OC, C, 3, 3) into 3 banded matrices, one per
    kernel row ky:  M[ky, xi*C + c, xo*OC + oc] = w[oc, c, ky, kx]
    with xi = stride*xo + kx - 1 (pad 1); out-of-range taps stay zero."""
    oc_n, c_n = w.shape[0], w.shape[1]
    m = np.zeros((3, w_in * c_n, w_out * oc_n), np.float32)
    for d in range(3):
        for xo in range(w_out):
            for k in range(3):
                xi = stride * xo + k - 1
                if 0 <= xi < w_in:
                    m[d, xi * c_n:(xi + 1) * c_n, xo * oc_n:(xo + 1) * oc_n] = w[:, :, d, k].T
    return m


def init_params(seed=42):
    rng = np.random.default_rng(seed)
    s = 0.05

    def rnd(*shape):
        return (rng.standard_normal(shape) * s).astype(np.float32)

    # raw torch-layout conv weights; critic conv1's 2nd input channel is zero
    w1a = rnd(C1, CIN, 3, 3)
    w1c = rnd(C1, CIN, 3, 3)
    w1c[:, 1] = 0.0
    w2a = rnd(C2, C1, 3, 3)
    w2c = rnd(C2, C1, 3, 3)
    b1a, b1c = rnd(C1), rnd(C1)
    b2a, b2c = rnd(C2), rnd(C2)

    # fc1 in (H2, W2*C2, NH) form == Linear(1024, 128) with flatten order (y',x',c);
    # fc2 zero-padded to 128 output lanes.
    f1a, f1c = rnd(H2, W2 * C2, NH), rnd(H2, W2 * C2, NH)
    g1a, g1c = rnd(NH), rnd(NH)
    f2a = np.zeros((NH, NH), np.float32); f2a[:, :N_A] = rnd(NH, N_A)
    f2c = np.zeros((NH, NH), np.float32); f2c[:, :1] = rnd(NH, 1)
    g2a = np.zeros(NH, np.float32); g2a[:N_A] = rnd(N_A)
    g2c = np.zeros(NH, np.float32); g2c[:1] = rnd(1)

    def merged_conv1(w):                              # (3,32,128) -> (96,128) -> (128,128)
        m = _banded(w, W, W, 1).reshape(3 * W * CIN, W * C1)
        return np.pad(m, ((0, NH - m.shape[0]), (0, 0)))

    def merged_conv2(w):                              # (3,128,128) -> (384,128)
        return _banded(w, W, W2, 2).reshape(3 * W * C1, W2 * C2)

    m1 = np.stack([merged_conv1(w1a), merged_conv1(w1c)])        # (2,128,128)
    m2 = np.stack([merged_conv2(w2a), merged_conv2(w2c)])        # (2,384,128)
    w1 = np.stack([f1a.reshape(K3, NH), f1c.reshape(K3, NH)])    # (2,1024,128)
    w2 = np.stack([f2a, f2c])                                    # (2,128,128)

    def bias_block(b1, b2, g1, g2):                   # 4 biases packed into one (8,128)
        bb = np.zeros((BP, NH), np.float32)
        bb[0] = np.tile(b1, W)       # conv1 bias over lanes (x, c1)
        bb[1] = np.tile(b2, W2)      # conv2 bias over lanes (x', c2)
        bb[2] = g1                   # fc1 bias
        bb[3] = g2                   # fc2 bias (padded lanes 0)
        return bb
    bias = np.stack([bias_block(b1a, b2a, g1a, g2a),
                     bias_block(b1c, b2c, g1c, g2c)])            # (2,8,128)

    # Gaussian-head constants derived from actor_logstd (zero-init parameter):
    # entropy, inv_var and the per-lane log_prob constant are hoisted out of the
    # kernel; decodeActions is folded into scale/shift; everything packed into
    # one (8,128) slab.
    logstd = np.zeros(N_A, np.float32)
    hconst = np.zeros((BP, NH), np.float32)
    hconst[0, :N_A] = -0.5 * np.exp(-2.0 * logstd)
    hconst[1, :N_A] = -logstd - 0.5 * LOG2PI
    scale = 0.5 * (_HI - _LO)
    hconst[2, :N_A] = scale
    hconst[3, :N_A] = scale + _LO
    hconst[3, N_A + 1] = float(N_A * (0.5 + 0.5 * LOG2PI) + logstd.sum())   # entropy.sum(1)
    hconst[4, N_A] = 1.0

    bf16 = jnp.bfloat16
    return dict(
        m1=jnp.asarray(m1, bf16), m2=jnp.asarray(m2, bf16),
        w1=jnp.asarray(w1, bf16), w2=jnp.asarray(w2, bf16),
        bias=jnp.asarray(bias), hconst=jnp.asarray(hconst),
    )


# --------------------------------- wrapper ------------------------------------
@jax.jit
def evaluate(params, state, obs, action):
    """Pallas equivalent of robot_actor_critic.evaluate(state, obs, action).
    Returns (actions, unscaled_actions, log_prob.sum(1), entropy.sum(1), value)."""
    b = obs.shape[0]
    obs_p = jnp.pad(obs[:, 0].astype(jnp.float32), ((0, BP - b), (0, 0), (0, 0)))
    st_p = jnp.pad(state.astype(jnp.float32), (0, BP - b))
    st_img = jnp.broadcast_to(st_p[:, None, None], (BP, H, W))
    xa = jnp.stack([obs_p, st_img], axis=-1)                  # actor: (obs, state)
    xc = jnp.stack([obs_p, jnp.zeros_like(obs_p)], axis=-1)   # critic: (obs, 0)
    x = jnp.stack([xa, xc], axis=0)                           # (2, BP, H, W, CIN)
    x = x.transpose(0, 2, 1, 3, 4).reshape(2, HB, W * CIN)    # rows=(y,b), lanes=(x,c)
    xp = jnp.pad(x, ((0, 0), (BP, BP), (0, 0)))               # zero y-group top/bottom
    # lanes=(ky, x, c): fold the 3 kernel rows into the contraction, pad to 128
    x3 = jnp.concatenate([xp[:, 0:HB], xp[:, BP:BP + HB], xp[:, 2 * BP:2 * BP + HB]],
                         axis=-1)                             # (2, 128, 96)
    x3 = jnp.pad(x3, ((0, 0), (0, 0), (0, NH - K1))).astype(jnp.bfloat16)   # (2,128,128)
    act_p = jnp.pad(action.astype(jnp.float32), ((0, BP - b), (0, NH - N_A)))

    out = pl.pallas_call(
        _evaluate_kernel,
        out_shape=jax.ShapeDtypeStruct((2, BP, NH), jnp.float32),
        grid=(2,),
        in_specs=[
            pl.BlockSpec((1, HB, NH), lambda i: (i, 0, 0)),   # x (ky-folded, bf16)
            pl.BlockSpec((1, NH, NH), lambda i: (i, 0, 0)),   # conv1 merged banded weight
            pl.BlockSpec((1, K2, NH), lambda i: (i, 0, 0)),   # conv2 merged banded weight
            pl.BlockSpec((1, K3, NH), lambda i: (i, 0, 0)),   # fc1 weight (1024,128)
            pl.BlockSpec((1, NH, NH), lambda i: (i, 0, 0)),   # fc2 weight (padded)
            pl.BlockSpec((1, BP, NH), lambda i: (i, 0, 0)),   # packed biases
            pl.BlockSpec((BP, NH), lambda i: (0, 0)),         # action (padded)
            pl.BlockSpec((BP, NH), lambda i: (0, 0)),         # head constants
        ],
        out_specs=pl.BlockSpec((1, BP, NH), lambda i: (i, 0, 0)),
        compiler_params=pltpu.CompilerParams(dimension_semantics=("parallel",)),
    )(x3, params["m1"], params["m2"], params["w1"], params["w2"],
      params["bias"], act_p, params["hconst"])

    a_slab = out[0]
    actions = a_slab[:b, :N_A]          # decodeActions(scaled)
    log_prob = a_slab[:b, N_A]          # Normal log_prob summed over action dims
    entropy = a_slab[:b, N_A + 1]       # Normal entropy summed over action dims
    value = out[1][:b, 0:1]             # critic(obs)
    return actions, action, log_prob, entropy, value


# ----------------------------------- main --------------------------------------
if __name__ == "__main__":
    key = jax.random.PRNGKey(0)
    k_obs, k_state, k_act = jax.random.split(key, 3)

    obs = jax.random.normal(k_obs, (B, 1, H, W), jnp.float32)
    state = jax.random.normal(k_state, (B,), jnp.float32)
    # TODO(synk): deterministic pre-drawn action instead of Normal.rsample().
    action = jax.random.normal(k_act, (B, N_A), jnp.float32)

    params = init_params(42)

    outs = evaluate(params, state, obs, action)
    jax.block_until_ready(outs)

    actions, unscaled_actions, log_prob, entropy, value = outs
    assert actions.shape == (B, N_A)
    assert unscaled_actions.shape == (B, N_A)
    assert log_prob.shape == (B,)
    assert entropy.shape == (B,)
    assert value.shape == (B, 1)
    print("KERNEL_OK")
</pallas_src>

<mosaic_0001>
module attributes {stable_mosaic.version = 11 : i64} {
  func.func @_evaluate_kernel(%arg0: i32, %arg1: memref<1x128x128xbf16, #tpu.memory_space<vmem>>, %arg2: memref<1x128x128xbf16, #tpu.memory_space<vmem>>, %arg3: memref<1x384x128xbf16, #tpu.memory_space<vmem>>, %arg4: memref<1x1024x128xbf16, #tpu.memory_space<vmem>>, %arg5: memref<1x128x128xbf16, #tpu.memory_space<vmem>>, %arg6: memref<1x8x128xf32, #tpu.memory_space<vmem>>, %arg7: memref<8x128xf32, #tpu.memory_space<vmem>>, %arg8: memref<8x128xf32, #tpu.memory_space<vmem>>, %arg9: memref<1x8x128xf32, #tpu.memory_space<vmem>>) attributes {dimension_semantics = [#tpu.dimension_semantics<parallel>], iteration_bounds = array<i64: 2>, scalar_prefetch = 0 : i64, scratch_operands = 0 : i64, tpu.core_type = #tpu.core_type<tc>, window_params = [{transform_indices = @transform_0, window_bounds = array<i64: 1, 128, 128>}, {transform_indices = @transform_1, window_bounds = array<i64: 1, 128, 128>}, {transform_indices = @transform_2, window_bounds = array<i64: 1, 384, 128>}, {transform_indices = @transform_3, window_bounds = array<i64: 1, 1024, 128>}, {transform_indices = @transform_4, window_bounds = array<i64: 1, 128, 128>}, {transform_indices = @transform_5, window_bounds = array<i64: 1, 8, 128>}, {pipeline_mode = #tpu.pipeline_mode<synchronous>, transform_indices = @transform_6, window_bounds = array<i64: 8, 128>}, {pipeline_mode = #tpu.pipeline_mode<synchronous>, transform_indices = @transform_7, window_bounds = array<i64: 8, 128>}, {transform_indices = @transform_8, window_bounds = array<i64: 1, 8, 128>}]} {
    %c0 = arith.constant 0 : index
    %c0_0 = arith.constant 0 : index
    %c0_1 = arith.constant 0 : index
    %0 = vector.load %arg6[%c0, %c0_0, %c0_1] : memref<1x8x128xf32, #tpu.memory_space<vmem>>, vector<1x8x128xf32>
    %1 = vector.shape_cast %0 : vector<1x8x128xf32> to vector<8x128xf32>
    %c0_2 = arith.constant 0 : index
    %c0_3 = arith.constant 0 : index
    %c0_4 = arith.constant 0 : index
    %2 = vector.load %arg1[%c0_2, %c0_3, %c0_4] : memref<1x128x128xbf16, #tpu.memory_space<vmem>>, vector<1x128x128xbf16>
    %3 = vector.shape_cast %2 : vector<1x128x128xbf16> to vector<128x128xbf16>
    %c0_5 = arith.constant 0 : index
    %c0_6 = arith.constant 0 : index
    %c0_7 = arith.constant 0 : index
    %4 = vector.load %arg2[%c0_5, %c0_6, %c0_7] : memref<1x128x128xbf16, #tpu.memory_space<vmem>>, vector<1x128x128xbf16>
    %5 = vector.shape_cast %4 : vector<1x128x128xbf16> to vector<128x128xbf16>
    %cst = arith.constant dense<0.000000e+00> : vector<128x128xf32>
    %6 = tpu.matmul %3, %5, %cst {dimension_numbers = #tpu.dot_dimension_numbers<[1], [0], [0], [1], [0, 0, 1, 1], [], []>} : vector<128x128xbf16>, vector<128x128xbf16>, vector<128x128xf32> -> vector<128x128xf32>
    %7 = vector.extract_strided_slice %1 {offsets = [0, 0], sizes = [1, 128], strides = [1, 1]} : vector<8x128xf32> to vector<1x128xf32>
    %8 = vector.broadcast %7 : vector<1x128xf32> to vector<128x128xf32>
    %9 = arith.addf %6, %8 : vector<128x128xf32>
    %cst_8 = arith.constant 0.000000e+00 : f32
    %10 = vector.broadcast %cst_8 : f32 to vector<128x128xf32>
    %11 = arith.maximumf %9, %10 : vector<128x128xf32>
    %cst_9 = arith.constant 0.000000e+00 : f32
    %12 = vector.broadcast %cst_9 : f32 to vector<8x128xf32>
    %13 = vector.extract_strided_slice %11 {offsets = [0, 0], sizes = [120, 128], strides = [1, 1]} : vector<128x128xf32> to vector<120x128xf32>
    %14 = tpu.concatenate %12, %13 in 0 : vector<8x128xf32>, vector<120x128xf32> -> vector<128x128xf32>
    %15 = vector.extract_strided_slice %11 {offsets = [8, 0], sizes = [120, 128], strides = [1, 1]} : vector<128x128xf32> to vector<120x128xf32>
    %16 = tpu.concatenate %15, %12 in 0 : vector<120x128xf32>, vector<8x128xf32> -> vector<128x128xf32>
    %17 = tpu.concatenate %14, %11, %16 in 1 : vector<128x128xf32>, vector<128x128xf32>, vector<128x128xf32> -> vector<128x384xf32>
    %18 = arith.truncf %17 : vector<128x384xf32> to vector<128x384xbf16>
    %c0_10 = arith.constant 0 : index
    %c0_11 = arith.constant 0 : index
    %c0_12 = arith.constant 0 : index
    %19 = vector.load %arg3[%c0_10, %c0_11, %c0_12] : memref<1x384x128xbf16, #tpu.memory_space<vmem>>, vector<1x384x128xbf16>
    %20 = vector.shape_cast %19 : vector<1x384x128xbf16> to vector<384x128xbf16>
    %cst_13 = arith.constant dense<0.000000e+00> : vector<128x128xf32>
    %21 = tpu.matmul %18, %20, %cst_13 {dimension_numbers = #tpu.dot_dimension_numbers<[1], [0], [0], [1], [0, 0, 1, 1], [], []>} : vector<128x384xbf16>, vector<384x128xbf16>, vector<128x128xf32> -> vector<128x128xf32>
    %22 = vector.extract_strided_slice %1 {offsets = [1, 0], sizes = [1, 128], strides = [1, 1]} : vector<8x128xf32> to vector<1x128xf32>
    %23 = vector.broadcast %22 : vector<1x128xf32> to vector<128x128xf32>
    %24 = arith.addf %21, %23 : vector<128x128xf32>
    %cst_14 = arith.constant 0.000000e+00 : f32
    %25 = vector.broadcast %cst_14 : f32 to vector<128x128xf32>
    %26 = arith.maximumf %24, %25 : vector<128x128xf32>
    %27 = vector.extract_strided_slice %26 {offsets = [0, 0], sizes = [8, 128], strides = [1, 1]} : vector<128x128xf32> to vector<8x128xf32>
    %28 = vector.extract_strided_slice %26 {offsets = [16, 0], sizes = [8, 128], strides = [1, 1]} : vector<128x128xf32> to vector<8x128xf32>
    %29 = vector.extract_strided_slice %26 {offsets = [32, 0], sizes = [8, 128], strides = [1, 1]} : vector<128x128xf32> to vector<8x128xf32>
    %30 = vector.extract_strided_slice %26 {offsets = [48, 0], sizes = [8, 128], strides = [1, 1]} : vector<128x128xf32> to vector<8x128xf32>
    %31 = vector.extract_strided_slice %26 {offsets = [64, 0], sizes = [8, 128], strides = [1, 1]} : vector<128x128xf32> to vector<8x128xf32>
    %32 = vector.extract_strided_slice %26 {offsets = [80, 0], sizes = [8, 128], strides = [1, 1]} : vector<128x128xf32> to vector<8x128xf32>
    %33 = vector.extract_strided_slice %26 {offsets = [96, 0], sizes = [8, 128], strides = [1, 1]} : vector<128x128xf32> to vector<8x128xf32>
    %34 = vector.extract_strided_slice %26 {offsets = [112, 0], sizes = [8, 128], strides = [1, 1]} : vector<128x128xf32> to vector<8x128xf32>
    %35 = tpu.concatenate %27, %28, %29, %30, %31, %32, %33, %34 in 1 : vector<8x128xf32>, vector<8x128xf32>, vector<8x128xf32>, vector<8x128xf32>, vector<8x128xf32>, vector<8x128xf32>, vector<8x128xf32>, vector<8x128xf32> -> vector<8x1024xf32>
    %36 = arith.truncf %35 : vector<8x1024xf32> to vector<8x1024xbf16>
    %c0_15 = arith.constant 0 : index
    %c0_16 = arith.constant 0 : index
    %c0_17 = arith.constant 0 : index
    %37 = vector.load %arg4[%c0_15, %c0_16, %c0_17] : memref<1x1024x128xbf16, #tpu.memory_space<vmem>>, vector<1x1024x128xbf16>
    %38 = vector.shape_cast %37 : vector<1x1024x128xbf16> to vector<1024x128xbf16>
    %cst_18 = arith.constant dense<0.000000e+00> : vector<8x128xf32>
    %39 = tpu.matmul %36, %38, %cst_18 {dimension_numbers = #tpu.dot_dimension_numbers<[1], [0], [0], [1], [0, 0, 1, 1], [], []>} : vector<8x1024xbf16>, vector<1024x128xbf16>, vector<8x128xf32> -> vector<8x128xf32>
    %40 = vector.extract_strided_slice %1 {offsets = [2, 0], sizes = [1, 128], strides = [1, 1]} : vector<8x128xf32> to vector<1x128xf32>
    %41 = vector.broadcast %40 : vector<1x128xf32> to vector<8x128xf32>
    %42 = arith.addf %39, %41 : vector<8x128xf32>
    %cst_19 = arith.constant 0.000000e+00 : f32
    %43 = vector.broadcast %cst_19 : f32 to vector<8x128xf32>
    %44 = arith.maximumf %42, %43 : vector<8x128xf32>
    %45 = arith.truncf %44 : vector<8x128xf32> to vector<8x128xbf16>
    %c0_20 = arith.constant 0 : index
    %c0_21 = arith.constant 0 : index
    %c0_22 = arith.constant 0 : index
    %46 = vector.load %arg5[%c0_20, %c0_21, %c0_22] : memref<1x128x128xbf16, #tpu.memory_space<vmem>>, vector<1x128x128xbf16>
    %47 = vector.shape_cast %46 : vector<1x128x128xbf16> to vector<128x128xbf16>
    %cst_23 = arith.constant dense<0.000000e+00> : vector<8x128xf32>
    %48 = tpu.matmul %45, %47, %cst_23 {dimension_numbers = #tpu.dot_dimension_numbers<[1], [0], [0], [1], [0, 0, 1, 1], [], []>} : vector<8x128xbf16>, vector<128x128xbf16>, vector<8x128xf32> -> vector<8x128xf32>
    %49 = vector.extract_strided_slice %1 {offsets = [3, 0], sizes = [1, 128], strides = [1, 1]} : vector<8x128xf32> to vector<1x128xf32>
    %50 = vector.broadcast %49 : vector<1x128xf32> to vector<8x128xf32>
    %51 = arith.addf %48, %50 : vector<8x128xf32>
    %c0_i32 = arith.constant 0 : i32
    %52 = arith.cmpi eq, %arg0, %c0_i32 : i32
    %53 = arith.extui %52 : i1 to i32
    %c0_i32_24 = arith.constant 0 : i32
    %54 = arith.cmpi ne, %53, %c0_i32_24 : i32
    scf.if %54 {
      %c0_26 = arith.constant 0 : index
      %c0_27 = arith.constant 0 : index
      %58 = vector.load %arg8[%c0_26, %c0_27] : memref<8x128xf32, #tpu.memory_space<vmem>>, vector<8x128xf32>
      %c0_28 = arith.constant 0 : index
      %c0_29 = arith.constant 0 : index
      %59 = vector.load %arg7[%c0_28, %c0_29] : memref<8x128xf32, #tpu.memory_space<vmem>>, vector<8x128xf32>
      %60 = arith.subf %59, %51 : vector<8x128xf32>
      %61 = arith.mulf %60, %60 : vector<8x128xf32>
      %62 = vector.extract_strided_slice %58 {offsets = [0, 0], sizes = [1, 128], strides = [1, 1]} : vector<8x128xf32> to vector<1x128xf32>
      %63 = vector.broadcast %62 : vector<1x128xf32> to vector<8x128xf32>
      %64 = arith.mulf %61, %63 : vector<8x128xf32>
      %65 = vector.extract_strided_slice %58 {offsets = [1, 0], sizes = [1, 128], strides = [1, 1]} : vector<8x128xf32> to vector<1x128xf32>
      %66 = vector.broadcast %65 : vector<1x128xf32> to vector<8x128xf32>
      %67 = arith.addf %64, %66 : vector<8x128xf32>
      %cst_30 = arith.constant dense<0.000000e+00> : vector<8xf32>
      %68 = vector.multi_reduction <add>, %67, %cst_30 [1] : vector<8x128xf32> to vector<8xf32>
      %69 = vector.shape_cast %68 : vector<8xf32> to vector<8x1xf32>
      %70 = vector.extract_strided_slice %58 {offsets = [2, 0], sizes = [1, 128], strides = [1, 1]} : vector<8x128xf32> to vector<1x128xf32>
      %71 = vector.broadcast %70 : vector<1x128xf32> to vector<8x128xf32>
      %72 = arith.mulf %59, %71 : vector<8x128xf32>
      %73 = vector.extract_strided_slice %58 {offsets = [3, 0], sizes = [1, 128], strides = [1, 1]} : vector<8x128xf32> to vector<1x128xf32>
      %74 = vector.broadcast %73 : vector<1x128xf32> to vector<8x128xf32>
      %75 = arith.addf %72, %74 : vector<8x128xf32>
      %76 = vector.extract_strided_slice %58 {offsets = [4, 0], sizes = [1, 128], strides = [1, 1]} : vector<8x128xf32> to vector<1x128xf32>
      %77 = vector.broadcast %69 : vector<8x1xf32> to vector<8x128xf32>
      %78 = vector.broadcast %76 : vector<1x128xf32> to vector<8x128xf32>
      %79 = arith.mulf %77, %78 : vector<8x128xf32>
      %80 = arith.addf %75, %79 : vector<8x128xf32>
      %c0_31 = arith.constant 0 : index
      %c0_32 = arith.constant 0 : index
      %c0_33 = arith.constant 0 : index
      %81 = vector.load %arg9[%c0_31, %c0_32, %c0_33] : memref<1x8x128xf32, #tpu.memory_space<vmem>>, vector<1x8x128xf32>
      %82 = vector.shape_cast %81 : vector<1x8x128xf32> to vector<8x128xf32>
      %83 = vector.shape_cast %80 : vector<8x128xf32> to vector<1x8x128xf32>
      tpu.vector_store %arg9[%c0_31, %c0_32, %c0_33], %83 {strides = array<i32>} : memref<1x8x128xf32, #tpu.memory_space<vmem>>, vector<1x8x128xf32>,
    } else {
    }
    %c1_i32 = arith.constant 1 : i32
    %55 = arith.cmpi eq, %arg0, %c1_i32 : i32
    %56 = arith.extui %55 : i1 to i32
    %c0_i32_25 = arith.constant 0 : i32
    %57 = arith.cmpi ne, %56, %c0_i32_25 : i32
    scf.if %57 {
      %c0_26 = arith.constant 0 : index
      %c0_27 = arith.constant 0 : index
      %c0_28 = arith.constant 0 : index
      %58 = vector.load %arg9[%c0_26, %c0_27, %c0_28] : memref<1x8x128xf32, #tpu.memory_space<vmem>>, vector<1x8x128xf32>
      %59 = vector.shape_cast %58 : vector<1x8x128xf32> to vector<8x128xf32>
      %60 = vector.shape_cast %51 : vector<8x128xf32> to vector<1x8x128xf32>
      tpu.vector_store %arg9[%c0_26, %c0_27, %c0_28], %60 {strides = array<i32>} : memref<1x8x128xf32, #tpu.memory_space<vmem>>, vector<1x8x128xf32>,
    } else {
    }
    return
  }
  func.func @transform_0(%arg0: i32) -> (i32, i32, i32) {
    %c0_i32 = arith.constant 0 : i32
    %c0_i32_0 = arith.constant 0 : i32
    %c0_i32_1 = arith.constant 0 : i32
    return %arg0, %c0_i32, %c0_i32_0 : i32, i32, i32
  }
  func.func @transform_1(%arg0: i32) -> (i32, i32, i32) {
    %c0_i32 = arith.constant 0 : i32
    %c0_i32_0 = arith.constant 0 : i32
    %c0_i32_1 = arith.constant 0 : i32
    return %arg0, %c0_i32, %c0_i32_0 : i32, i32, i32
  }
  func.func @transform_2(%arg0: i32) -> (i32, i32, i32) {
    %c0_i32 = arith.constant 0 : i32
    %c0_i32_0 = arith.constant 0 : i32
    %c0_i32_1 = arith.constant 0 : i32
    return %arg0, %c0_i32, %c0_i32_0 : i32, i32, i32
  }
  func.func @transform_3(%arg0: i32) -> (i32, i32, i32) {
    %c0_i32 = arith.constant 0 : i32
    %c0_i32_0 = arith.constant 0 : i32
    %c0_i32_1 = arith.constant 0 : i32
    return %arg0, %c0_i32, %c0_i32_0 : i32, i32, i32
  }
  func.func @transform_4(%arg0: i32) -> (i32, i32, i32) {
    %c0_i32 = arith.constant 0 : i32
    %c0_i32_0 = arith.constant 0 : i32
    %c0_i32_1 = arith.constant 0 : i32
    return %arg0, %c0_i32, %c0_i32_0 : i32, i32, i32
  }
  func.func @transform_5(%arg0: i32) -> (i32, i32, i32) {
    %c0_i32 = arith.constant 0 : i32
    %c0_i32_0 = arith.constant 0 : i32
    %c0_i32_1 = arith.constant 0 : i32
    return %arg0, %c0_i32, %c0_i32_0 : i32, i32, i32
  }
  func.func @transform_6(%arg0: i32) -> (i32, i32) {
    %c0_i32 = arith.constant 0 : i32
    %c0_i32_0 = arith.constant 0 : i32
    %c0_i32_1 = arith.constant 0 : i32
    return %c0_i32, %c0_i32_0 : i32, i32
  }
  func.func @transform_7(%arg0: i32) -> (i32, i32) {
    %c0_i32 = arith.constant 0 : i32
    %c0_i32_0 = arith.constant 0 : i32
    %c0_i32_1 = arith.constant 0 : i32
    return %c0_i32, %c0_i32_0 : i32, i32
  }
  func.func @transform_8(%arg0: i32) -> (i32, i32, i32) {
    %c0_i32 = arith.constant 0 : i32
    %c0_i32_0 = arith.constant 0 : i32
    %c0_i32_1 = arith.constant 0 : i32
    return %arg0, %c0_i32, %c0_i32_0 : i32, i32, i32
  }
}

</mosaic_0001>

<llo_original>
// kernel: evaluate.1
$region0: #{evaluate.1}
  #allocation0 [shape = 'u32[]', space=smem, size = 0x4, offset = 0x4, fixed_abs, tag = 'smem constant byte address 0x4 - core index']
  #allocation1 [shape = 'u32[144,128]{1,0:T(1,128)}', space=vmem, size = 0x12000, scoped, tag = 'internal scratch']
  %s0 = inlined_call_operand.vmem [shape: bf16[2,128,128], index: 0, kind: input, shape index: {}]
  %s1 = inlined_call_operand.vmem [shape: bf16[2,128,128], index: 1, kind: input, shape index: {}]
  %s2 = inlined_call_operand.vmem [shape: bf16[2,384,128], index: 2, kind: input, shape index: {}]
  %s3 = inlined_call_operand.vmem [shape: bf16[2,1024,128], index: 3, kind: input, shape index: {}]
  %s4 = inlined_call_operand.vmem [shape: bf16[2,128,128], index: 4, kind: input, shape index: {}]
  %s5 = inlined_call_operand.vmem [shape: f32[2,8,128], index: 5, kind: input, shape index: {}]
  %s6 = inlined_call_operand.vmem [shape: f32[8,128], index: 6, kind: input, shape index: {}]
  %s7 = inlined_call_operand.vmem [shape: f32[8,128], index: 7, kind: input, shape index: {}]
  %s8 = inlined_call_operand.vmem [shape: f32[2,8,128], index: 8, kind: output, shape index: {}]
  %s9 = sld [smem:[#allocation0]]
  $region73: #{evaluate.1} parent=0
    _
  %s11 = ssub.s32 1, %s9
  %s12 = scalar_select 0, %s11, %s9
  loop: start=0, step=1, limit=4
  $region2: #{evaluate.1} parent=0 // loop_pre_header
    _
  $region3: #{evaluate.1} parent=0 // loop_header
    %s14 = sphi 0, %s18
    %p15 = scmp.ge.s32.totalorder %s14, 4
    %s24 = sphi 0, %s26
    %s27 = sphi 0, %s24
    %s28 = sphi 0, %s27
    %s44 = sphi 0, %s28
    %s50 = sphi 0, %s52
    %s53 = sphi 0, %s50
    %s54 = sphi 0, %s53
    %s70 = sphi 0, %s54
    %s76 = sphi 0, %s78
    %s79 = sphi 0, %s76
    %s80 = sphi 0, %s79
    %s96 = sphi 0, %s80
    %s102 = sphi 0, %s104
    %s105 = sphi 0, %s102
    %s106 = sphi 0, %s105
    %s122 = sphi 0, %s106
    %s128 = sphi 0, %s130
    %s131 = sphi 0, %s128
    %s132 = sphi 0, %s131
    %s148 = sphi 0, %s132
    %s154 = sphi 0, %s156
    %s157 = sphi 0, %s154
    %s158 = sphi 0, %s157
    %s174 = sphi 0, %s158
    %s178 = sphi 0, %s178
    %s180 = sphi 0, %s178
    %s181 = sphi 0, %s180
    %s195 = sphi 0, %s181
    %s199 = sphi 0, %s199
    %s201 = sphi 0, %s199
    %s202 = sphi 0, %s201
    %s216 = sphi 0, %s202
    %s222 = sphi 0, %s224
    %s225 = sphi 0, %s222
    %s226 = sphi 0, %s225
    %s242 = sphi 0, %s226
  $region4: #{evaluate.1} parent=0 // loop_header_branch
    %17 = sbr.rel (%p15) target = $region8
  $region5: #{evaluate.1} parent=0 // loop_body
    %s19 = ssub.s32 %s14, 1
    %s20 = ssub.s32 %s14, 2
    %s21 = sadd.s32 %s14, 1
    %s22 = ssub.s32 %s14, %s21
    %p23 = scmp.eq.s32.totalorder %s22, 0
    %s25 = sadd.s32 %s24, 1
    %s26 = scalar_select %p23, %s24, %s25
    %p29 = pneg %p23
    %p30 = scmp.eq.s32.totalorder %s14, 1
    %p31 = por %p29, %p30
    %p32 = scmp.ne.s32.totalorder %s24, %s27
    %p33 = scmp.eq.s32.totalorder %s14, 0
    %p34 = por %p32, %p33
    %p35 = scmp.ne.s32.totalorder %s24, %s27
    %p36 = scmp.eq.s32.totalorder %s19, 1
    %p37 = por %p35, %p36
    %p38 = scmp.ne.s32.totalorder %s27, %s28
    %p39 = scmp.eq.s32.totalorder %s19, 0
    %p40 = por %p38, %p39
    %p41 = scmp.ne.s32.totalorder %s27, %s28
    %p42 = scmp.eq.s32.totalorder %s20, 1
    %p43 = por %p41, %p42
    %p45 = scmp.ne.s32.totalorder %s28, %s44
    %p46 = scmp.eq.s32.totalorder %s20, 0
    %p47 = por %p45, %p46
    %s48 = ssub.s32 %s14, %s21
    %p49 = scmp.eq.s32.totalorder %s48, 0
    %s51 = sadd.s32 %s50, 1
    %s52 = scalar_select %p49, %s50, %s51
    %p55 = pneg %p49
    %p56 = scmp.eq.s32.totalorder %s14, 1
    %p57 = por %p55, %p56
    %p58 = scmp.ne.s32.totalorder %s50, %s53
    %p59 = scmp.eq.s32.totalorder %s14, 0
    %p60 = por %p58, %p59
    %p61 = scmp.ne.s32.totalorder %s50, %s53
    %p62 = scmp.eq.s32.totalorder %s19, 1
    %p63 = por %p61, %p62
    %p64 = scmp.ne.s32.totalorder %s53, %s54
    %p65 = scmp.eq.s32.totalorder %s19, 0
    %p66 = por %p64, %p65
    %p67 = scmp.ne.s32.totalorder %s53, %s54
    %p68 = scmp.eq.s32.totalorder %s20, 1
    %p69 = por %p67, %p68
    %p71 = scmp.ne.s32.totalorder %s54, %s70
    %p72 = scmp.eq.s32.totalorder %s20, 0
    %p73 = por %p71, %p72
    %s74 = ssub.s32 %s14, %s21
    %p75 = scmp.eq.s32.totalorder %s74, 0
    %s77 = sadd.s32 %s76, 1
    %s78 = scalar_select %p75, %s76, %s77
    %p81 = pneg %p75
    %p82 = scmp.eq.s32.totalorder %s14, 1
    %p83 = por %p81, %p82
    %p84 = scmp.ne.s32.totalorder %s76, %s79
    %p85 = scmp.eq.s32.totalorder %s14, 0
    %p86 = por %p84, %p85
    %p87 = scmp.ne.s32.totalorder %s76, %s79
    %p88 = scmp.eq.s32.totalorder %s19, 1
    %p89 = por %p87, %p88
    %p90 = scmp.ne.s32.totalorder %s79, %s80
    %p91 = scmp.eq.s32.totalorder %s19, 0
    %p92 = por %p90, %p91
    %p93 = scmp.ne.s32.totalorder %s79, %s80
    %p94 = scmp.eq.s32.totalorder %s20, 1
    %p95 = por %p93, %p94
    %p97 = scmp.ne.s32.totalorder %s80, %s96
    %p98 = scmp.eq.s32.totalorder %s20, 0
    %p99 = por %p97, %p98
    %s100 = ssub.s32 %s14, %s21
    %p101 = scmp.eq.s32.totalorder %s100, 0
    %s103 = sadd.s32 %s102, 1
    %s104 = scalar_select %p101, %s102, %s103
    %p107 = pneg %p101
    %p108 = scmp.eq.s32.totalorder %s14, 1
    %p109 = por %p107, %p108
    %p110 = scmp.ne.s32.totalorder %s102, %s105
    %p111 = scmp.eq.s32.totalorder %s14, 0
    %p112 = por %p110, %p111
    %p113 = scmp.ne.s32.totalorder %s102, %s105
    %p114 = scmp.eq.s32.totalorder %s19, 1
    %p115 = por %p113, %p114
    %p116 = scmp.ne.s32.totalorder %s105, %s106
    %p117 = scmp.eq.s32.totalorder %s19, 0
    %p118 = por %p116, %p117
    %p119 = scmp.ne.s32.totalorder %s105, %s106
    %p120 = scmp.eq.s32.totalorder %s20, 1
    %p121 = por %p119, %p120
    %p123 = scmp.ne.s32.totalorder %s106, %s122
    %p124 = scmp.eq.s32.totalorder %s20, 0
    %p125 = por %p123, %p124
    %s126 = ssub.s32 %s14, %s21
    %p127 = scmp.eq.s32.totalorder %s126, 0
    %s129 = sadd.s32 %s128, 1
    %s130 = scalar_select %p127, %s128, %s129
    %p133 = pneg %p127
    %p134 = scmp.eq.s32.totalorder %s14, 1
    %p135 = por %p133, %p134
    %p136 = scmp.ne.s32.totalorder %s128, %s131
    %p137 = scmp.eq.s32.totalorder %s14, 0
    %p138 = por %p136, %p137
    %p139 = scmp.ne.s32.totalorder %s128, %s131
    %p140 = scmp.eq.s32.totalorder %s19, 1
    %p141 = por %p139, %p140
    %p142 = scmp.ne.s32.totalorder %s131, %s132
    %p143 = scmp.eq.s32.totalorder %s19, 0
    %p144 = por %p142, %p143
    %p145 = scmp.ne.s32.totalorder %s131, %s132
    %p146 = scmp.eq.s32.totalorder %s20, 1
    %p147 = por %p145, %p146
    %p149 = scmp.ne.s32.totalorder %s132, %s148
    %p150 = scmp.eq.s32.totalorder %s20, 0
    %p151 = por %p149, %p150
    %s152 = ssub.s32 %s14, %s21
    %p153 = scmp.eq.s32.totalorder %s152, 0
    %s155 = sadd.s32 %s154, 1
    %s156 = scalar_select %p153, %s154, %s155
    %p159 = pneg %p153
    %p160 = scmp.eq.s32.totalorder %s14, 1
    %p161 = por %p159, %p160
    %p162 = scmp.ne.s32.totalorder %s154, %s157
    %p163 = scmp.eq.s32.totalorder %s14, 0
    %p164 = por %p162, %p163
    %p165 = scmp.ne.s32.totalorder %s154, %s157
    %p166 = scmp.eq.s32.totalorder %s19, 1
    %p167 = por %p165, %p166
    %p168 = scmp.ne.s32.totalorder %s157, %s158
    %p169 = scmp.eq.s32.totalorder %s19, 0
    %p170 = por %p168, %p169
    %p171 = scmp.ne.s32.totalorder %s157, %s158
    %p172 = scmp.eq.s32.totalorder %s20, 1
    %p173 = por %p171, %p172
    %p175 = scmp.ne.s32.totalorder %s158, %s174
    %p176 = scmp.eq.s32.totalorder %s20, 0
    %p177 = por %p175, %p176
    %s179 = sadd.s32 %s178, 1
    %p182 = scmp.eq.s32.totalorder %s14, 1
    %p183 = scmp.ne.s32.totalorder %s178, %s180
    %p184 = scmp.eq.s32.totalorder %s14, 0
    %p185 = por %p183, %p184
    %p186 = scmp.ne.s32.totalorder %s178, %s180
    %p187 = scmp.eq.s32.totalorder %s19, 1
    %p188 = por %p186, %p187
    %p189 = scmp.ne.s32.totalorder %s180, %s181
    %p190 = scmp.eq.s32.totalorder %s19, 0
    %p191 = por %p189, %p190
    %p192 = scmp.ne.s32.totalorder %s180, %s181
    %p193 = scmp.eq.s32.totalorder %s20, 1
    %p194 = por %p192, %p193
    %p196 = scmp.ne.s32.totalorder %s181, %s195
    %p197 = scmp.eq.s32.totalorder %s20, 0
    %p198 = por %p196, %p197
    %s200 = sadd.s32 %s199, 1
    %p203 = scmp.eq.s32.totalorder %s14, 1
    %p204 = scmp.ne.s32.totalorder %s199, %s201
    %p205 = scmp.eq.s32.totalorder %s14, 0
    %p206 = por %p204, %p205
    %p207 = scmp.ne.s32.totalorder %s199, %s201
    %p208 = scmp.eq.s32.totalorder %s19, 1
    %p209 = por %p207, %p208
    %p210 = scmp.ne.s32.totalorder %s201, %s202
    %p211 = scmp.eq.s32.totalorder %s19, 0
    %p212 = por %p210, %p211
    %p213 = scmp.ne.s32.totalorder %s201, %s202
    %p214 = scmp.eq.s32.totalorder %s20, 1
    %p215 = por %p213, %p214
    %p217 = scmp.ne.s32.totalorder %s202, %s216
    %p218 = scmp.eq.s32.totalorder %s20, 0
    %p219 = por %p217, %p218
    %s220 = ssub.s32 %s14, %s21
    %p221 = scmp.eq.s32.totalorder %s220, 0
    %s223 = sadd.s32 %s222, 1
    %s224 = scalar_select %p221, %s222, %s223
    %p227 = pneg %p221
    %p228 = scmp.eq.s32.totalorder %s14, 1
    %p229 = por %p227, %p228
    %p230 = scmp.ne.s32.totalorder %s222, %s225
    %p231 = scmp.eq.s32.totalorder %s14, 0
    %p232 = por %p230, %p231
    %p233 = scmp.ne.s32.totalorder %s222, %s225
    %p234 = scmp.eq.s32.totalorder %s19, 1
    %p235 = por %p233, %p234
    %p236 = scmp.ne.s32.totalorder %s225, %s226
    %p237 = scmp.eq.s32.totalorder %s19, 0
    %p238 = por %p236, %p237
    %p239 = scmp.ne.s32.totalorder %s225, %s226
    %p240 = scmp.eq.s32.totalorder %s20, 1
    %p241 = por %p239, %p240
    %p243 = scmp.ne.s32.totalorder %s226, %s242
    %p244 = scmp.eq.s32.totalorder %s20, 0
    %p245 = por %p243, %p244
    %p246 = scmp.le.s32.totalorder 1, %s14
    %p247 = scmp.lt.s32.totalorder %s14, 3
    %p248 = pnand %p246, %p247
    %p249 = pneg %p248
    // Predicated region
    $region9: #{evaluate.1} parent=5 // pred_check
      _
    $region10: #{evaluate.1} parent=5 // pred_check_branch
      %251 = sbr.rel (%p248) target = $region12
    $region11: #{evaluate.1} parent=5 // pred_region
      %s252 = ssub.s32 %s14, 1
      // Predicated region
      $region13: #{evaluate.1} parent=11 // pred_check
        %p253 = pneg %p191
      $region14: #{evaluate.1} parent=11 // pred_check_branch
        %255 = sbr.rel (%p253) target = $region16
      $region15: #{evaluate.1} parent=11 // pred_region
        _
      $region16: #{evaluate.1} parent=11 // pred_fallthru
        _
      // Predicated region
      $region17: #{evaluate.1} parent=11 // pred_check
        %p256 = pneg %p212
      $region18: #{evaluate.1} parent=11 // pred_check_branch
        %258 = sbr.rel (%p256) target = $region20
      $region19: #{evaluate.1} parent=11 // pred_region
        _
      $region20: #{evaluate.1} parent=11 // pred_fallthru
        _
    $region12: #{evaluate.1} parent=5 // pred_fallthru
      _
    %p259 = scmp.lt.s32.totalorder %s14, 2
    // Predicated region
    $region21: #{evaluate.1} parent=5 // pred_check
      %p260 = pneg %p259
    $region22: #{evaluate.1} parent=5 // pred_check_branch
      %262 = sbr.rel (%p260) target = $region24
    $region23: #{evaluate.1} parent=5 // pred_region
      // Predicated region
      $region25: #{evaluate.1} parent=23 // pred_check
        %p263 = pneg %p34
      $region26: #{evaluate.1} parent=23 // pred_check_branch
        %265 = sbr.rel (%p263) target = $region28
      $region27: #{evaluate.1} parent=23 // pred_region
        %p266 = scmp.lt.s32.totalorder %s14, 1
        %s267 = scalar_select %p266, %s14, 1
        %s268 = smul.addr %s267, 16
        %s269 = smul.addr %s268, 4
        %s270 = scalar_lea.vmem %s0, %s269
      $region28: #{evaluate.1} parent=23 // pred_fallthru
        _
      // Predicated region
      $region29: #{evaluate.1} parent=23 // pred_check
        %p271 = pneg %p60
      $region30: #{evaluate.1} parent=23 // pred_check_branch
        %273 = sbr.rel (%p271) target = $region32
      $region31: #{evaluate.1} parent=23 // pred_region
        %p274 = scmp.lt.s32.totalorder %s14, 1
        %s275 = scalar_select %p274, %s14, 1
        %s276 = smul.addr %s275, 16
        %s277 = smul.addr %s276, 4
        %s278 = scalar_lea.vmem %s1, %s277
      $region32: #{evaluate.1} parent=23 // pred_fallthru
        _
      // Predicated region
      $region33: #{evaluate.1} parent=23 // pred_check
        %p279 = pneg %p86
      $region34: #{evaluate.1} parent=23 // pred_check_branch
        %281 = sbr.rel (%p279) target = $region36
      $region35: #{evaluate.1} parent=23 // pred_region
        %p282 = scmp.lt.s32.totalorder %s14, 1
        %s283 = scalar_select %p282, %s14, 1
        %s284 = smul.addr %s283, 48
        %s285 = smul.addr %s284, 4
        %s286 = scalar_lea.vmem %s2, %s285
      $region36: #{evaluate.1} parent=23 // pred_fallthru
        _
      // Predicated region
      $region37: #{evaluate.1} parent=23 // pred_check
        %p287 = pneg %p112
      $region38: #{evaluate.1} parent=23 // pred_check_branch
        %289 = sbr.rel (%p287) target = $region40
      $region39: #{evaluate.1} parent=23 // pred_region
        %p290 = scmp.lt.s32.totalorder %s14, 1
        %s291 = scalar_select %p290, %s14, 1
        %s292 = smul.addr %s291, 128
        %s293 = smul.addr %s292, 4
        %s294 = scalar_lea.vmem %s3, %s293
      $region40: #{evaluate.1} parent=23 // pred_fallthru
        _
      // Predicated region
      $region41: #{evaluate.1} parent=23 // pred_check
        %p295 = pneg %p138
      $region42: #{evaluate.1} parent=23 // pred_check_branch
        %297 = sbr.rel (%p295) target = $region44
      $region43: #{evaluate.1} parent=23 // pred_region
        %p298 = scmp.lt.s32.totalorder %s14, 1
        %s299 = scalar_select %p298, %s14, 1
        %s300 = smul.addr %s299, 16
        %s301 = smul.addr %s300, 4
        %s302 = scalar_lea.vmem %s4, %s301
      $region44: #{evaluate.1} parent=23 // pred_fallthru
        _
      // Predicated region
      $region45: #{evaluate.1} parent=23 // pred_check
        %p303 = pneg %p164
      $region46: #{evaluate.1} parent=23 // pred_check_branch
        %305 = sbr.rel (%p303) target = $region48
      $region47: #{evaluate.1} parent=23 // pred_region
        %p306 = scmp.lt.s32.totalorder %s14, 1
        %s307 = scalar_select %p306, %s14, 1
        %s308 = smul.addr %s307, 8
        %s309 = scalar_lea.vmem %s5, %s308
      $region48: #{evaluate.1} parent=23 // pred_fallthru
        _
    $region24: #{evaluate.1} parent=5 // pred_fallthru
      _
    %p310 = scmp.le.s32.totalorder 1, %s14
    %p311 = scmp.lt.s32.totalorder %s14, 3
    %p312 = pnand %p310, %p311
    %p313 = pneg %p312
    // Predicated region
    $region49: #{evaluate.1} parent=5 // pred_check
      _
    $region50: #{evaluate.1} parent=5 // pred_check_branch
      %315 = sbr.rel (%p312) target = $region52
    $region51: #{evaluate.1} parent=5 // pred_region
      %s316 = ssub.s32 %s14, 1
      %p317 = scmp.lt.s32.totalorder %s19, 1
      %s318 = scalar_select %p317, %s19, 1
      %s319 = smul.addr %s318, 16
      %s320 = smul.addr %s319, 4
      %s321 = scalar_lea.vmem %s0, %s320
      %p322 = pneg %p40
      %p323 = pneg %p37
      %p324 = scmp.lt.s32.totalorder %s19, 1
      %s325 = scalar_select %p324, %s19, 1
      %s326 = smul.addr %s325, 16
      %s327 = smul.addr %s326, 4
      %s328 = scalar_lea.vmem %s1, %s327
      %p329 = pneg %p66
      %p330 = pneg %p63
      %p331 = scmp.lt.s32.totalorder %s19, 1
      %s332 = scalar_select %p331, %s19, 1
      %s333 = smul.addr %s332, 48
      %s334 = smul.addr %s333, 4
      %s335 = scalar_lea.vmem %s2, %s334
      %p336 = pneg %p92
      %p337 = pneg %p89
      %p338 = scmp.lt.s32.totalorder %s19, 1
      %s339 = scalar_select %p338, %s19, 1
      %s340 = smul.addr %s339, 128
      %s341 = smul.addr %s340, 4
      %s342 = scalar_lea.vmem %s3, %s341
      %p343 = pneg %p118
      %p344 = pneg %p115
      %p345 = scmp.lt.s32.totalorder %s19, 1
      %s346 = scalar_select %p345, %s19, 1
      %s347 = smul.addr %s346, 16
      %s348 = smul.addr %s347, 4
      %s349 = scalar_lea.vmem %s4, %s348
      %p350 = pneg %p144
      %p351 = pneg %p141
      %p352 = scmp.lt.s32.totalorder %s19, 1
      %s353 = scalar_select %p352, %s19, 1
      %s354 = smul.addr %s353, 8
      %s355 = scalar_lea.vmem %s5, %s354
      %p356 = pneg %p170
      %p357 = pneg %p167
      %p358 = pneg %p191
      %p359 = pneg %p188
      %p360 = pneg %p212
      %p361 = pneg %p209
      %p362 = pneg %p238
      %p363 = pneg %p235
      %p364 = scmp.lt.s32.totalorder %s19, 1
      %s365 = scalar_select %p364, %s19, 1
      %s366 = smul.addr %s365, 8
      %s367 = scalar_lea.vmem %s8, %s366
      %p368 = scmp.lt.s32.totalorder %s19, 1
      %s369 = scalar_select %p368, %s19, 1
      %s370 = smul.addr %s369, 16
      %s371 = smul.addr %s370, 4
      %s372 = scalar_lea.vmem %s0, %s371
      %p373 = scmp.lt.s32.totalorder %s19, 1
      %s374 = scalar_select %p373, %s19, 1
      %s375 = smul.addr %s374, 16
      %s376 = smul.addr %s375, 4
      %s377 = scalar_lea.vmem %s1, %s376
      %p378 = scmp.lt.s32.totalorder %s19, 1
      %s379 = scalar_select %p378, %s19, 1
      %s380 = smul.addr %s379, 48
      %s381 = smul.addr %s380, 4
      %s382 = scalar_lea.vmem %s2, %s381
      %p383 = scmp.lt.s32.totalorder %s19, 1
      %s384 = scalar_select %p383, %s19, 1
      %s385 = smul.addr %s384, 128
      %s386 = smul.addr %s385, 4
      %s387 = scalar_lea.vmem %s3, %s386
      %p388 = scmp.lt.s32.totalorder %s19, 1
      %s389 = scalar_select %p388, %s19, 1
      %s390 = smul.addr %s389, 16
      %s391 = smul.addr %s390, 4
      %s392 = scalar_lea.vmem %s4, %s391
      %p393 = scmp.lt.s32.totalorder %s19, 1
      %s394 = scalar_select %p393, %s19, 1
      %s395 = smul.addr %s394, 8
      %s396 = scalar_lea.vmem %s5, %s395
      %p397 = scmp.lt.s32.totalorder %s19, 1
      %s398 = scalar_select %p397, %s19, 1
      %s399 = smul.addr %s398, 8
      %s400 = scalar_lea.vmem %s8, %s399
      %v402 = vld [vmem:[%s396] sm:$0xff]
      %v403 = vld [vmem:[%s372] sm:$0xf]
      %v404 = vld [vmem:[%s372 + $0x4] sm:$0xf]
      %v405 = vld [vmem:[%s372 + $0x8] sm:$0xf]
      %v406 = vld [vmem:[%s372 + $0xc] sm:$0xf]
      %v407 = vld [vmem:[%s372 + $0x10] sm:$0xf]
      %v408 = vld [vmem:[%s372 + $0x14] sm:$0xf]
      %v409 = vld [vmem:[%s372 + $0x18] sm:$0xf]
      %v410 = vld [vmem:[%s372 + $0x1c] sm:$0xf]
      %v411 = vld [vmem:[%s372 + $0x20] sm:$0xf]
      %v412 = vld [vmem:[%s372 + $0x24] sm:$0xf]
      %v413 = vld [vmem:[%s372 + $0x28] sm:$0xf]
      %v414 = vld [vmem:[%s372 + $0x2c] sm:$0xf]
      %v415 = vld [vmem:[%s372 + $0x30] sm:$0xf]
      %v416 = vld [vmem:[%s372 + $0x34] sm:$0xf]
      %v417 = vld [vmem:[%s372 + $0x38] sm:$0xf]
      %v418 = vld [vmem:[%s372 + $0x3c] sm:$0xf]
      %v419 = vld [vmem:[%s377] sm:$0xf]
      %v420 = vld [vmem:[%s377 + $0x4] sm:$0xf]
      %v421 = vld [vmem:[%s377 + $0x8] sm:$0xf]
      %v422 = vld [vmem:[%s377 + $0xc] sm:$0xf]
      %v423 = vld [vmem:[%s377 + $0x10] sm:$0xf]
      %v424 = vld [vmem:[%s377 + $0x14] sm:$0xf]
      %v425 = vld [vmem:[%s377 + $0x18] sm:$0xf]
      %v426 = vld [vmem:[%s377 + $0x1c] sm:$0xf]
      %v427 = vld [vmem:[%s377 + $0x20] sm:$0xf]
      %v428 = vld [vmem:[%s377 + $0x24] sm:$0xf]
      %v429 = vld [vmem:[%s377 + $0x28] sm:$0xf]
      %v430 = vld [vmem:[%s377 + $0x2c] sm:$0xf]
      %v431 = vld [vmem:[%s377 + $0x30] sm:$0xf]
      %v432 = vld [vmem:[%s377 + $0x34] sm:$0xf]
      %v433 = vld [vmem:[%s377 + $0x38] sm:$0xf]
      %v434 = vld [vmem:[%s377 + $0x3c] sm:$0xf]
      %v435 = vlaneseq
      %v436 = vshrl.u32 %v435, 7
      %v437 = vsub.s32 0, %v436
      %v438 = vrot.slane %v402, %v437
      %v455 = vunpack.c.l.b16 %v403
      %v456 = vunpack.c.l.b16 %v404
      %v457 = vunpack.c.l.b16 %v405
      %v458 = vunpack.c.l.b16 %v406
      %v459 = vunpack.c.l.b16 %v407
      %v460 = vunpack.c.l.b16 %v408
      %v461 = vunpack.c.l.b16 %v409
      %v462 = vunpack.c.l.b16 %v410
      %v463 = vunpack.c.l.b16 %v411
      %v464 = vunpack.c.l.b16 %v412
      %v465 = vunpack.c.l.b16 %v413
      %v466 = vunpack.c.l.b16 %v414
      %v467 = vunpack.c.l.b16 %v415
      %v468 = vunpack.c.l.b16 %v416
      %v469 = vunpack.c.l.b16 %v417
      %v470 = vunpack.c.l.b16 %v418
      %v471 = vpack.c.b16 %v456, %v455
      %v472 = vpack.c.b16 %v458, %v457
      %v473 = vpack.c.b16 %v460, %v459
      %v474 = vpack.c.b16 %v462, %v461
      %v475 = vpack.c.b16 %v464, %v463
      %v476 = vpack.c.b16 %v466, %v465
      %v477 = vpack.c.b16 %v468, %v467
      %v478 = vpack.c.b16 %v470, %v469
      %v503 = vunpack.c.l.b16 %v419
      %v504 = vunpack.c.l.b16 %v420
      %v505 = vunpack.c.l.b16 %v421
      %v506 = vunpack.c.l.b16 %v422
      %v507 = vunpack.c.l.b16 %v423
      %v508 = vunpack.c.l.b16 %v424
      %v509 = vunpack.c.l.b16 %v425
      %v510 = vunpack.c.l.b16 %v426
      %v511 = vunpack.c.l.b16 %v427
      %v512 = vunpack.c.l.b16 %v428
      %v513 = vunpack.c.l.b16 %v429
      %v514 = vunpack.c.l.b16 %v430
      %v515 = vunpack.c.l.b16 %v431
      %v516 = vunpack.c.l.b16 %v432
      %v517 = vunpack.c.l.b16 %v433
      %v518 = vunpack.c.l.b16 %v434
      %v519 = vpack.c.b16 %v504, %v503
      %v520 = vpack.c.b16 %v506, %v505
      %v521 = vpack.c.b16 %v508, %v507
      %v522 = vpack.c.b16 %v510, %v509
      %v523 = vpack.c.b16 %v512, %v511
      %v524 = vpack.c.b16 %v514, %v513
      %v525 = vpack.c.b16 %v516, %v515
      %v526 = vpack.c.b16 %v518, %v517
      %535 = vmatprep.subr.bf16.mxu0 0
      %536 = vmatpush1.bf16.msra.mxu0 %v519
      %537 = vmatprep.subr.bf16.mxu0 0
      %538 = vmatpush1.bf16.msra.mxu0 %v520
      %539 = vmatprep.subr.bf16.mxu0 0
      %540 = vmatpush1.bf16.msra.mxu0 %v521
      %541 = vmatprep.subr.bf16.mxu0 0
      %542 = vmatpush1.bf16.msra.mxu0 %v522
      %543 = vmatprep.subr.bf16.mxu0 0
      %544 = vmatpush1.bf16.msra.mxu0 %v523
      %545 = vmatprep.subr.bf16.mxu0 0
      %546 = vmatpush1.bf16.msra.mxu0 %v524
      %547 = vmatprep.subr.bf16.mxu0 0
      %548 = vmatpush1.bf16.msra.mxu0 %v525
      %549 = vmatprep.subr.bf16.mxu0 0
      %550 = vmatpush1.bf16.msra.mxu0 %v526
      %551 = vmatprep.subr.bf16.mxu0 0
      %552 = vmatpush1.bf16.msra.mxu0 0
      %553 = vmatprep.subr.bf16.mxu0 0
      %554 = vmatpush1.bf16.msra.mxu0 0
      %555 = vmatprep.subr.bf16.mxu0 0
      %556 = vmatpush1.bf16.msra.mxu0 0
      %557 = vmatprep.subr.bf16.mxu0 0
      %558 = vmatpush1.bf16.msra.mxu0 0
      %559 = vmatprep.subr.bf16.mxu0 0
      %560 = vmatpush1.bf16.msra.mxu0 0
      %561 = vmatprep.subr.bf16.mxu0 0
      %562 = vmatpush1.bf16.msra.mxu0 0
      %563 = vmatprep.subr.bf16.mxu0 0
      %564 = vmatpush1.bf16.msra.mxu0 0
      %565 = vmatprep.subr.bf16.mxu0 0
      %566 = vmatpush1.bf16.msra.mxu0 0
      %567 = vmatprep.mubr.bf16.mxu0 0
      %568 = vmatmul.mubr.bf16.gmra.mrb[0].mxu0 %v471
      %v569 = vpop.f32.mrb[0].mxu0
      %v570 = vadd.f32 %v438, %v569
      %v571 = vpop.f32.mrb[0].mxu0
      %v572 = vpop.f32.mrb[0].mxu0
      %v573 = vadd.f32 %v438, %v572
      %v574 = vpop.f32.mrb[0].mxu0
      %575 = vmatprep.mubr.bf16.mxu0 0
      %576 = vmatmul.mubr.bf16.gmra.mrb[0].mxu0 %v472
      %v577 = vpop.f32.mrb[0].mxu0
      %v578 = vadd.f32 %v438, %v577
      %v579 = vpop.f32.mrb[0].mxu0
      %v580 = vpop.f32.mrb[0].mxu0
      %v581 = vadd.f32 %v438, %v580
      %v582 = vpop.f32.mrb[0].mxu0
      %583 = vmatprep.mubr.bf16.mxu0 0
      %584 = vmatmul.mubr.bf16.gmra.mrb[0].mxu0 %v473
      %v585 = vpop.f32.mrb[0].mxu0
      %v586 = vadd.f32 %v438, %v585
      %v587 = vpop.f32.mrb[0].mxu0
      %v588 = vpop.f32.mrb[0].mxu0
      %v589 = vadd.f32 %v438, %v588
      %v590 = vpop.f32.mrb[0].mxu0
      %591 = vmatprep.mubr.bf16.mxu0 0
      %592 = vmatmul.mubr.bf16.gmra.mrb[0].mxu0 %v474
      %v593 = vpop.f32.mrb[0].mxu0
      %v594 = vadd.f32 %v438, %v593
      %v595 = vpop.f32.mrb[0].mxu0
      %v596 = vpop.f32.mrb[0].mxu0
      %v597 = vadd.f32 %v438, %v596
      %v598 = vpop.f32.mrb[0].mxu0
      %599 = vmatprep.mubr.bf16.mxu0 0
      %600 = vmatmul.mubr.bf16.gmra.mrb[0].mxu0 %v475
      %v601 = vpop.f32.mrb[0].mxu0
      %v602 = vadd.f32 %v438, %v601
      %v603 = vpop.f32.mrb[0].mxu0
      %v604 = vpop.f32.mrb[0].mxu0
      %v605 = vadd.f32 %v438, %v604
      %v606 = vpop.f32.mrb[0].mxu0
      %607 = vmatprep.mubr.bf16.mxu0 0
      %608 = vmatmul.mubr.bf16.gmra.mrb[0].mxu0 %v476
      %v609 = vpop.f32.mrb[0].mxu0
      %v610 = vadd.f32 %v438, %v609
      %v611 = vpop.f32.mrb[0].mxu0
      %v612 = vpop.f32.mrb[0].mxu0
      %v613 = vadd.f32 %v438, %v612
      %v614 = vpop.f32.mrb[0].mxu0
      %615 = vmatprep.mubr.bf16.mxu0 0
      %616 = vmatmul.mubr.bf16.gmra.mrb[0].mxu0 %v477
      %v617 = vpop.f32.mrb[0].mxu0
      %v618 = vadd.f32 %v438, %v617
      %v619 = vpop.f32.mrb[0].mxu0
      %v620 = vpop.f32.mrb[0].mxu0
      %v621 = vadd.f32 %v438, %v620
      %v622 = vpop.f32.mrb[0].mxu0
      %623 = vmatprep.mubr.bf16.mxu0 0
      %624 = vmatmul.mubr.bf16.gmra.mrb[0].mxu0 %v478
      %v625 = vpop.f32.mrb[0].mxu0
      %v626 = vadd.f32 %v438, %v625
      %v627 = vpop.f32.mrb[0].mxu0
      %v628 = vpop.f32.mrb[0].mxu0
      %v629 = vadd.f32 %v438, %v628
      %v630 = vpop.f32.mrb[0].mxu0
      %631 = vdwg.mxu0
      %v632 = vmax.f32 %v570, 0.0
      %v633 = vmax.f32 %v573, 0.0
      %v634 = vmax.f32 %v578, 0.0
      %v635 = vmax.f32 %v581, 0.0
      %v636 = vmax.f32 %v586, 0.0
      %v637 = vmax.f32 %v589, 0.0
      %v638 = vmax.f32 %v594, 0.0
      %v639 = vmax.f32 %v597, 0.0
      %v640 = vmax.f32 %v602, 0.0
      %v641 = vmax.f32 %v605, 0.0
      %v642 = vmax.f32 %v610, 0.0
      %v643 = vmax.f32 %v613, 0.0
      %v644 = vmax.f32 %v618, 0.0
      %v645 = vmax.f32 %v621, 0.0
      %v646 = vmax.f32 %v626, 0.0
      %v647 = vmax.f32 %v629, 0.0
      %v648 = vpack.c.bf16 %v632, 0.0
      %v649 = vpack.c.bf16 %v633, %v632
      %v650 = vpack.c.bf16 %v634, %v633
      %v651 = vpack.c.bf16 %v635, %v634
      %v652 = vpack.c.bf16 %v636, %v635
      %v653 = vpack.c.bf16 %v637, %v636
      %v654 = vpack.c.bf16 %v638, %v637
      %v655 = vpack.c.bf16 %v639, %v638
      %v656 = vpack.c.bf16 %v640, %v639
      %v657 = vpack.c.bf16 %v641, %v640
      %v658 = vpack.c.bf16 %v642, %v641
      %v659 = vpack.c.bf16 %v643, %v642
      %v660 = vpack.c.bf16 %v644, %v643
      %v661 = vpack.c.bf16 %v645, %v644
      %v662 = vpack.c.bf16 %v646, %v645
      %v663 = vpack.c.bf16 %v647, %v646
      %v664 = vpack.c.bf16 0.0, %v647
      %v665 = vld [vmem:[%s382] sm:$0xf]
      %v666 = vld [vmem:[%s382 + $0x4] sm:$0xf]
      %v667 = vld [vmem:[%s382 + $0x8] sm:$0xf]
      %v668 = vld [vmem:[%s382 + $0xc] sm:$0xf]
      %v669 = vld [vmem:[%s382 + $0x10] sm:$0xf]
      %v670 = vld [vmem:[%s382 + $0x14] sm:$0xf]
      %v671 = vld [vmem:[%s382 + $0x18] sm:$0xf]
      %v672 = vld [vmem:[%s382 + $0x1c] sm:$0xf]
      %v673 = vld [vmem:[%s382 + $0x20] sm:$0xf]
      %v674 = vld [vmem:[%s382 + $0x24] sm:$0xf]
      %v675 = vld [vmem:[%s382 + $0x28] sm:$0xf]
      %v676 = vld [vmem:[%s382 + $0x2c] sm:$0xf]
      %v677 = vld [vmem:[%s382 + $0x30] sm:$0xf]
      %v678 = vld [vmem:[%s382 + $0x34] sm:$0xf]
      %v679 = vld [vmem:[%s382 + $0x38] sm:$0xf]
      %v680 = vld [vmem:[%s382 + $0x3c] sm:$0xf]
      %v681 = vld [vmem:[%s382 + $0x40] sm:$0xf]
      %v682 = vld [vmem:[%s382 + $0x44] sm:$0xf]
      %v683 = vld [vmem:[%s382 + $0x48] sm:$0xf]
      %v684 = vld [vmem:[%s382 + $0x4c] sm:$0xf]
      %v685 = vld [vmem:[%s382 + $0x50] sm:$0xf]
      %v686 = vld [vmem:[%s382 + $0x54] sm:$0xf]
      %v687 = vld [vmem:[%s382 + $0x58] sm:$0xf]
      %v688 = vld [vmem:[%s382 + $0x5c] sm:$0xf]
      %v689 = vld [vmem:[%s382 + $0x60] sm:$0xf]
      %v690 = vld [vmem:[%s382 + $0x64] sm:$0xf]
      %v691 = vld [vmem:[%s382 + $0x68] sm:$0xf]
      %v692 = vld [vmem:[%s382 + $0x6c] sm:$0xf]
      %v693 = vld [vmem:[%s382 + $0x70] sm:$0xf]
      %v694 = vld [vmem:[%s382 + $0x74] sm:$0xf]
      %v695 = vld [vmem:[%s382 + $0x78] sm:$0xf]
      %v696 = vld [vmem:[%s382 + $0x7c] sm:$0xf]
      %v697 = vld [vmem:[%s382 + $0x80] sm:$0xf]
      %v698 = vld [vmem:[%s382 + $0x84] sm:$0xf]
      %v699 = vld [vmem:[%s382 + $0x88] sm:$0xf]
      %v700 = vld [vmem:[%s382 + $0x8c] sm:$0xf]
      %v701 = vld [vmem:[%s382 + $0x90] sm:$0xf]
      %v702 = vld [vmem:[%s382 + $0x94] sm:$0xf]
      %v703 = vld [vmem:[%s382 + $0x98] sm:$0xf]
      %v704 = vld [vmem:[%s382 + $0x9c] sm:$0xf]
      %v705 = vld [vmem:[%s382 + $0xa0] sm:$0xf]
      %v706 = vld [vmem:[%s382 + $0xa4] sm:$0xf]
      %v707 = vld [vmem:[%s382 + $0xa8] sm:$0xf]
      %v708 = vld [vmem:[%s382 + $0xac] sm:$0xf]
      %v709 = vld [vmem:[%s382 + $0xb0] sm:$0xf]
      %v710 = vld [vmem:[%s382 + $0xb4] sm:$0xf]
      %v711 = vld [vmem:[%s382 + $0xb8] sm:$0xf]
      %v712 = vld [vmem:[%s382 + $0xbc] sm:$0xf]
      %v713 = vlaneseq
      %v714 = vshrl.u32 %v713, 7
      %v715 = vsub.s32 1, %v714
      %v716 = vrot.slane %v402, %v715
      %v765 = vunpack.c.l.b16 %v665
      %v766 = vunpack.c.l.b16 %v666
      %v767 = vunpack.c.l.b16 %v667
      %v768 = vunpack.c.l.b16 %v668
      %v769 = vunpack.c.l.b16 %v669
      %v770 = vunpack.c.l.b16 %v670
      %v771 = vunpack.c.l.b16 %v671
      %v772 = vunpack.c.l.b16 %v672
      %v773 = vunpack.c.l.b16 %v673
      %v774 = vunpack.c.l.b16 %v674
      %v775 = vunpack.c.l.b16 %v675
      %v776 = vunpack.c.l.b16 %v676
      %v777 = vunpack.c.l.b16 %v677
      %v778 = vunpack.c.l.b16 %v678
      %v779 = vunpack.c.l.b16 %v679
      %v780 = vunpack.c.l.b16 %v680
      %v781 = vunpack.c.l.b16 %v681
      %v782 = vunpack.c.l.b16 %v682
      %v783 = vunpack.c.l.b16 %v683
      %v784 = vunpack.c.l.b16 %v684
      %v785 = vunpack.c.l.b16 %v685
      %v786 = vunpack.c.l.b16 %v686
      %v787 = vunpack.c.l.b16 %v687
      %v788 = vunpack.c.l.b16 %v688
      %v789 = vunpack.c.l.b16 %v689
      %v790 = vunpack.c.l.b16 %v690
      %v791 = vunpack.c.l.b16 %v691
      %v792 = vunpack.c.l.b16 %v692
      %v793 = vunpack.c.l.b16 %v693
      %v794 = vunpack.c.l.b16 %v694
      %v795 = vunpack.c.l.b16 %v695
      %v796 = vunpack.c.l.b16 %v696
      %v797 = vunpack.c.l.b16 %v697
      %v798 = vunpack.c.l.b16 %v698
      %v799 = vunpack.c.l.b16 %v699
      %v800 = vunpack.c.l.b16 %v700
      %v801 = vunpack.c.l.b16 %v701
      %v802 = vunpack.c.l.b16 %v702
      %v803 = vunpack.c.l.b16 %v703
      %v804 = vunpack.c.l.b16 %v704
      %v805 = vunpack.c.l.b16 %v705
      %v806 = vunpack.c.l.b16 %v706
      %v807 = vunpack.c.l.b16 %v707
      %v808 = vunpack.c.l.b16 %v708
      %v809 = vunpack.c.l.b16 %v709
      %v810 = vunpack.c.l.b16 %v710
      %v811 = vunpack.c.l.b16 %v711
      %v812 = vunpack.c.l.b16 %v712
      %v813 = vpack.c.b16 %v766, %v765
      %v814 = vpack.c.b16 %v768, %v767
      %v815 = vpack.c.b16 %v770, %v769
      %v816 = vpack.c.b16 %v772, %v771
      %v817 = vpack.c.b16 %v774, %v773
      %v818 = vpack.c.b16 %v776, %v775
      %v819 = vpack.c.b16 %v778, %v777
      %v820 = vpack.c.b16 %v780, %v779
      %v821 = vpack.c.b16 %v782, %v781
      %v822 = vpack.c.b16 %v784, %v783
      %v823 = vpack.c.b16 %v786, %v785
      %v824 = vpack.c.b16 %v788, %v787
      %v825 = vpack.c.b16 %v790, %v789
      %v826 = vpack.c.b16 %v792, %v791
      %v827 = vpack.c.b16 %v794, %v793
      %v828 = vpack.c.b16 %v796, %v795
      %v829 = vpack.c.b16 %v798, %v797
      %v830 = vpack.c.b16 %v800, %v799
      %v831 = vpack.c.b16 %v802, %v801
      %v832 = vpack.c.b16 %v804, %v803
      %v833 = vpack.c.b16 %v806, %v805
      %v834 = vpack.c.b16 %v808, %v807
      %v835 = vpack.c.b16 %v810, %v809
      %v836 = vpack.c.b16 %v812, %v811
      %861 = vmatprep.subr.bf16.mxu0 0
      %862 = vmatpush1.bf16.msra.mxu0 %v813
      %863 = vmatprep.subr.bf16.mxu0 0
      %864 = vmatpush1.bf16.msra.mxu0 %v814
      %865 = vmatprep.subr.bf16.mxu0 0
      %866 = vmatpush1.bf16.msra.mxu0 %v815
      %867 = vmatprep.subr.bf16.mxu0 0
      %868 = vmatpush1.bf16.msra.mxu0 %v816
      %869 = vmatprep.subr.bf16.mxu0 0
      %870 = vmatpush1.bf16.msra.mxu0 %v817
      %871 = vmatprep.subr.bf16.mxu0 0
      %872 = vmatpush1.bf16.msra.mxu0 %v818
      %873 = vmatprep.subr.bf16.mxu0 0
      %874 = vmatpush1.bf16.msra.mxu0 %v819
      %875 = vmatprep.subr.bf16.mxu0 0
      %876 = vmatpush1.bf16.msra.mxu0 %v820
      %877 = vmatprep.subr.bf16.mxu0 0
      %878 = vmatpush1.bf16.msra.mxu0 %v821
      %879 = vmatprep.subr.bf16.mxu0 0
      %880 = vmatpush1.bf16.msra.mxu0 %v822
      %881 = vmatprep.subr.bf16.mxu0 0
      %882 = vmatpush1.bf16.msra.mxu0 %v823
      %883 = vmatprep.subr.bf16.mxu0 0
      %884 = vmatpush1.bf16.msra.mxu0 %v824
      %885 = vmatprep.subr.bf16.mxu0 0
      %886 = vmatpush1.bf16.msra.mxu0 %v825
      %887 = vmatprep.subr.bf16.mxu0 0
      %888 = vmatpush1.bf16.msra.mxu0 %v826
      %889 = vmatprep.subr.bf16.mxu0 0
      %890 = vmatpush1.bf16.msra.mxu0 %v827
      %891 = vmatprep.subr.bf16.mxu0 0
      %892 = vmatpush1.bf16.msra.mxu0 %v828
      %893 = vmatprep.mubr.bf16.mxu0 %v649
      %894 = vmatmul.mubr.bf16.gmra.mrb[0].mxu0 %v648
      %v895 = vpop.f32.mrb[0].mxu0
      %v896 = vadd.f32 %v716, %v895
      %v897 = vpop.f32.mrb[0].mxu0
      %v898 = vpop.f32.mrb[0].mxu0
      %v899 = vpop.f32.mrb[0].mxu0
      %900 = vmatprep.mubr.bf16.mxu0 %v651
      %901 = vmatmul.mubr.bf16.gmra.mrb[0].mxu0 %v650
      %v902 = vpop.f32.mrb[0].mxu0
      %v903 = vadd.f32 %v716, %v902
      %v904 = vpop.f32.mrb[0].mxu0
      %v905 = vpop.f32.mrb[0].mxu0
      %v906 = vpop.f32.mrb[0].mxu0
      %907 = vmatprep.mubr.bf16.mxu0 %v653
      %908 = vmatmul.mubr.bf16.gmra.mrb[0].mxu0 %v652
      %v909 = vpop.f32.mrb[0].mxu0
      %v910 = vadd.f32 %v716, %v909
      %v911 = vpop.f32.mrb[0].mxu0
      %v912 = vpop.f32.mrb[0].mxu0
      %v913 = vpop.f32.mrb[0].mxu0
      %914 = vmatprep.mubr.bf16.mxu0 %v655
      %915 = vmatmul.mubr.bf16.gmra.mrb[0].mxu0 %v654
      %v916 = vpop.f32.mrb[0].mxu0
      %v917 = vadd.f32 %v716, %v916
      %v918 = vpop.f32.mrb[0].mxu0
      %v919 = vpop.f32.mrb[0].mxu0
      %v920 = vpop.f32.mrb[0].mxu0
      %921 = vmatprep.mubr.bf16.mxu0 %v657
      %922 = vmatmul.mubr.bf16.gmra.mrb[0].mxu0 %v656
      %v923 = vpop.f32.mrb[0].mxu0
      %v924 = vadd.f32 %v716, %v923
      %v925 = vpop.f32.mrb[0].mxu0
      %v926 = vpop.f32.mrb[0].mxu0
      %v927 = vpop.f32.mrb[0].mxu0
      %928 = vmatprep.mubr.bf16.mxu0 %v659
      %929 = vmatmul.mubr.bf16.gmra.mrb[0].mxu0 %v658
      %v930 = vpop.f32.mrb[0].mxu0
      %v931 = vadd.f32 %v716, %v930
      %v932 = vpop.f32.mrb[0].mxu0
      %v933 = vpop.f32.mrb[0].mxu0
      %v934 = vpop.f32.mrb[0].mxu0
      %935 = vmatprep.mubr.bf16.mxu0 %v661
      %936 = vmatmul.mubr.bf16.gmra.mrb[0].mxu0 %v660
      %v937 = vpop.f32.mrb[0].mxu0
      %v938 = vadd.f32 %v716, %v937
      %v939 = vpop.f32.mrb[0].mxu0
      %v940 = vpop.f32.mrb[0].mxu0
      %v941 = vpop.f32.mrb[0].mxu0
      %942 = vmatprep.mubr.bf16.mxu0 %v663
      %943 = vmatmul.mubr.bf16.gmra.mrb[0].mxu0 %v662
      %v944 = vpop.f32.mrb[0].mxu0
      %v945 = vadd.f32 %v716, %v944
      %v946 = vpop.f32.mrb[0].mxu0
      %v947 = vpop.f32.mrb[0].mxu0
      %v948 = vpop.f32.mrb[0].mxu0
      %949 = vdwg.mxu0
      %950 = vmatprep.subr.bf16.mxu0 0
      %951 = vmatpush1.bf16.msra.mxu0 %v829
      %952 = vmatprep.subr.bf16.mxu0 0
      %953 = vmatpush1.bf16.msra.mxu0 %v830
      %954 = vmatprep.subr.bf16.mxu0 0
      %955 = vmatpush1.bf16.msra.mxu0 %v831
      %956 = vmatprep.subr.bf16.mxu0 0
      %957 = vmatpush1.bf16.msra.mxu0 %v832
      %958 = vmatprep.subr.bf16.mxu0 0
      %959 = vmatpush1.bf16.msra.mxu0 %v833
      %960 = vmatprep.subr.bf16.mxu0 0
      %961 = vmatpush1.bf16.msra.mxu0 %v834
      %962 = vmatprep.subr.bf16.mxu0 0
      %963 = vmatpush1.bf16.msra.mxu0 %v835
      %964 = vmatprep.subr.bf16.mxu0 0
      %965 = vmatpush1.bf16.msra.mxu0 %v836
      %966 = vmatprep.subr.bf16.mxu0 0
      %967 = vmatpush1.bf16.msra.mxu0 0
      %968 = vmatprep.subr.bf16.mxu0 0
      %969 = vmatpush1.bf16.msra.mxu0 0
      %970 = vmatprep.subr.bf16.mxu0 0
      %971 = vmatpush1.bf16.msra.mxu0 0
      %972 = vmatprep.subr.bf16.mxu0 0
      %973 = vmatpush1.bf16.msra.mxu0 0
      %974 = vmatprep.subr.bf16.mxu0 0
      %975 = vmatpush1.bf16.msra.mxu0 0
      %976 = vmatprep.subr.bf16.mxu0 0
      %977 = vmatpush1.bf16.msra.mxu0 0
      %978 = vmatprep.subr.bf16.mxu0 0
      %979 = vmatpush1.bf16.msra.mxu0 0
      %980 = vmatprep.subr.bf16.mxu0 0
      %981 = vmatpush1.bf16.msra.mxu0 0
      %982 = vmatprep.mubr.bf16.mxu0 0
      %983 = vmatmul.mubr.bf16.gmra.mrb[0].mxu0 %v650
      %v984 = vpop.f32.mrb[0].mxu0
      %v985 = vadd.f32 %v896, %v984
      %v986 = vpop.f32.mrb[0].mxu0
      %v987 = vpop.f32.mrb[0].mxu0
      %v988 = vpop.f32.mrb[0].mxu0
      %989 = vmatprep.mubr.bf16.mxu0 0
      %990 = vmatmul.mubr.bf16.gmra.mrb[0].mxu0 %v652
      %v991 = vpop.f32.mrb[0].mxu0
      %v992 = vadd.f32 %v903, %v991
      %v993 = vpop.f32.mrb[0].mxu0
      %v994 = vpop.f32.mrb[0].mxu0
      %v995 = vpop.f32.mrb[0].mxu0
      %996 = vmatprep.mubr.bf16.mxu0 0
      %997 = vmatmul.mubr.bf16.gmra.mrb[0].mxu0 %v654
      %v998 = vpop.f32.mrb[0].mxu0
      %v999 = vadd.f32 %v910, %v998
      %v1000 = vpop.f32.mrb[0].mxu0
      %v1001 = vpop.f32.mrb[0].mxu0
      %v1002 = vpop.f32.mrb[0].mxu0
      %1003 = vmatprep.mubr.bf16.mxu0 0
      %1004 = vmatmul.mubr.bf16.gmra.mrb[0].mxu0 %v656
      %v1005 = vpop.f32.mrb[0].mxu0
      %v1006 = vadd.f32 %v917, %v1005
      %v1007 = vpop.f32.mrb[0].mxu0
      %v1008 = vpop.f32.mrb[0].mxu0
      %v1009 = vpop.f32.mrb[0].mxu0
      %1010 = vmatprep.mubr.bf16.mxu0 0
      %1011 = vmatmul.mubr.bf16.gmra.mrb[0].mxu0 %v658
      %v1012 = vpop.f32.mrb[0].mxu0
      %v1013 = vadd.f32 %v924, %v1012
      %v1014 = vpop.f32.mrb[0].mxu0
      %v1015 = vpop.f32.mrb[0].mxu0
      %v1016 = vpop.f32.mrb[0].mxu0
      %1017 = vmatprep.mubr.bf16.mxu0 0
      %1018 = vmatmul.mubr.bf16.gmra.mrb[0].mxu0 %v660
      %v1019 = vpop.f32.mrb[0].mxu0
      %v1020 = vadd.f32 %v931, %v1019
      %v1021 = vpop.f32.mrb[0].mxu0
      %v1022 = vpop.f32.mrb[0].mxu0
      %v1023 = vpop.f32.mrb[0].mxu0
      %1024 = vmatprep.mubr.bf16.mxu0 0
      %1025 = vmatmul.mubr.bf16.gmra.mrb[0].mxu0 %v662
      %v1026 = vpop.f32.mrb[0].mxu0
      %v1027 = vadd.f32 %v938, %v1026
      %v1028 = vpop.f32.mrb[0].mxu0
      %v1029 = vpop.f32.mrb[0].mxu0
      %v1030 = vpop.f32.mrb[0].mxu0
      %1031 = vmatprep.mubr.bf16.mxu0 0
      %1032 = vmatmul.mubr.bf16.gmra.mrb[0].mxu0 %v664
      %v1033 = vpop.f32.mrb[0].mxu0
      %v1034 = vadd.f32 %v945, %v1033
      %v1035 = vpop.f32.mrb[0].mxu0
      %v1036 = vpop.f32.mrb[0].mxu0
      %v1037 = vpop.f32.mrb[0].mxu0
      %1038 = vdwg.mxu0
      %v1039 = vmax.f32 %v985, 0.0
      %v1040 = vmax.f32 %v992, 0.0
      %v1041 = vmax.f32 %v999, 0.0
      %v1042 = vmax.f32 %v1006, 0.0
      %v1043 = vmax.f32 %v1013, 0.0
      %v1044 = vmax.f32 %v1020, 0.0
      %v1045 = vmax.f32 %v1027, 0.0
      %v1046 = vmax.f32 %v1034, 0.0
      %v1047 = vpack.c.bf16 %v1039, %v1039
      %v1048 = vpack.c.bf16 %v1040, %v1040
      %v1049 = vpack.c.bf16 %v1041, %v1041
      %v1050 = vpack.c.bf16 %v1042, %v1042
      %v1051 = vpack.c.bf16 %v1043, %v1043
      %v1052 = vpack.c.bf16 %v1044, %v1044
      %v1053 = vpack.c.bf16 %v1045, %v1045
      %v1054 = vpack.c.bf16 %v1046, %v1046
      %v1055 = vld [vmem:[%s387] sm:$0xf]
      %v1056 = vld [vmem:[%s387 + $0x4] sm:$0xf]
      %v1057 = vld [vmem:[%s387 + $0x8] sm:$0xf]
      %v1058 = vld [vmem:[%s387 + $0xc] sm:$0xf]
      %v1059 = vld [vmem:[%s387 + $0x10] sm:$0xf]
      %v1060 = vld [vmem:[%s387 + $0x14] sm:$0xf]
      %v1061 = vld [vmem:[%s387 + $0x18] sm:$0xf]
      %v1062 = vld [vmem:[%s387 + $0x1c] sm:$0xf]
      %v1063 = vld [vmem:[%s387 + $0x20] sm:$0xf]
      %v1064 = vld [vmem:[%s387 + $0x24] sm:$0xf]
      %v1065 = vld [vmem:[%s387 + $0x28] sm:$0xf]
      %v1066 = vld [vmem:[%s387 + $0x2c] sm:$0xf]
      %v1067 = vld [vmem:[%s387 + $0x30] sm:$0xf]
      %v1068 = vld [vmem:[%s387 + $0x34] sm:$0xf]
      %v1069 = vld [vmem:[%s387 + $0x38] sm:$0xf]
      %v1070 = vld [vmem:[%s387 + $0x3c] sm:$0xf]
      %v1071 = vld [vmem:[%s387 + $0x40] sm:$0xf]
      %v1072 = vld [vmem:[%s387 + $0x44] sm:$0xf]
      %v1073 = vld [vmem:[%s387 + $0x48] sm:$0xf]
      %v1074 = vld [vmem:[%s387 + $0x4c] sm:$0xf]
      %v1075 = vld [vmem:[%s387 + $0x50] sm:$0xf]
      %v1076 = vld [vmem:[%s387 + $0x54] sm:$0xf]
      %v1077 = vld [vmem:[%s387 + $0x58] sm:$0xf]
      %v1078 = vld [vmem:[%s387 + $0x5c] sm:$0xf]
      %v1079 = vld [vmem:[%s387 + $0x60] sm:$0xf]
      %v1080 = vld [vmem:[%s387 + $0x64] sm:$0xf]
      %v1081 = vld [vmem:[%s387 + $0x68] sm:$0xf]
      %v1082 = vld [vmem:[%s387 + $0x6c] sm:$0xf]
      %v1083 = vld [vmem:[%s387 + $0x70] sm:$0xf]
      %v1084 = vld [vmem:[%s387 + $0x74] sm:$0xf]
      %v1085 = vld [vmem:[%s387 + $0x78] sm:$0xf]
      %v1086 = vld [vmem:[%s387 + $0x7c] sm:$0xf]
      %v1087 = vld [vmem:[%s387 + $0x80] sm:$0xf]
      %v1088 = vld [vmem:[%s387 + $0x84] sm:$0xf]
      %v1089 = vld [vmem:[%s387 + $0x88] sm:$0xf]
      %v1090 = vld [vmem:[%s387 + $0x8c] sm:$0xf]
      %v1091 = vld [vmem:[%s387 + $0x90] sm:$0xf]
      %v1092 = vld [vmem:[%s387 + $0x94] sm:$0xf]
      %v1093 = vld [vmem:[%s387 + $0x98] sm:$0xf]
      %v1094 = vld [vmem:[%s387 + $0x9c] sm:$0xf]
      %v1095 = vld [vmem:[%s387 + $0xa0] sm:$0xf]
      %v1096 = vld [vmem:[%s387 + $0xa4] sm:$0xf]
      %v1097 = vld [vmem:[%s387 + $0xa8] sm:$0xf]
      %v1098 = vld [vmem:[%s387 + $0xac] sm:$0xf]
      %v1099 = vld [vmem:[%s387 + $0xb0] sm:$0xf]
      %v1100 = vld [vmem:[%s387 + $0xb4] sm:$0xf]
      %v1101 = vld [vmem:[%s387 + $0xb8] sm:$0xf]
      %v1102 = vld [vmem:[%s387 + $0xbc] sm:$0xf]
      %v1103 = vld [vmem:[%s387 + $0xc0] sm:$0xf]
      %v1104 = vld [vmem:[%s387 + $0xc4] sm:$0xf]
      %v1105 = vld [vmem:[%s387 + $0xc8] sm:$0xf]
      %v1106 = vld [vmem:[%s387 + $0xcc] sm:$0xf]
      %v1107 = vld [vmem:[%s387 + $0xd0] sm:$0xf]
      %v1108 = vld [vmem:[%s387 + $0xd4] sm:$0xf]
      %v1109 = vld [vmem:[%s387 + $0xd8] sm:$0xf]
      %v1110 = vld [vmem:[%s387 + $0xdc] sm:$0xf]
      %v1111 = vld [vmem:[%s387 + $0xe0] sm:$0xf]
      %v1112 = vld [vmem:[%s387 + $0xe4] sm:$0xf]
      %v1113 = vld [vmem:[%s387 + $0xe8] sm:$0xf]
      %v1114 = vld [vmem:[%s387 + $0xec] sm:$0xf]
      %v1115 = vld [vmem:[%s387 + $0xf0] sm:$0xf]
      %v1116 = vld [vmem:[%s387 + $0xf4] sm:$0xf]
      %v1117 = vld [vmem:[%s387 + $0xf8] sm:$0xf]
      %v1118 = vld [vmem:[%s387 + $0xfc] sm:$0xf]
      %v1119 = vld [vmem:[%s387 + $0x100] sm:$0xf]
      %v1120 = vld [vmem:[%s387 + $0x104] sm:$0xf]
      %v1121 = vld [vmem:[%s387 + $0x108] sm:$0xf]
      %v1122 = vld [vmem:[%s387 + $0x10c] sm:$0xf]
      %v1123 = vld [vmem:[%s387 + $0x110] sm:$0xf]
      %v1124 = vld [vmem:[%s387 + $0x114] sm:$0xf]
      %v1125 = vld [vmem:[%s387 + $0x118] sm:$0xf]
      %v1126 = vld [vmem:[%s387 + $0x11c] sm:$0xf]
      %v1127 = vld [vmem:[%s387 + $0x120] sm:$0xf]
      %v1128 = vld [vmem:[%s387 + $0x124] sm:$0xf]
      %v1129 = vld [vmem:[%s387 + $0x128] sm:$0xf]
      %v1130 = vld [vmem:[%s387 + $0x12c] sm:$0xf]
      %v1131 = vld [vmem:[%s387 + $0x130] sm:$0xf]
      %v1132 = vld [vmem:[%s387 + $0x134] sm:$0xf]
      %v1133 = vld [vmem:[%s387 + $0x138] sm:$0xf]
      %v1134 = vld [vmem:[%s387 + $0x13c] sm:$0xf]
      %v1135 = vld [vmem:[%s387 + $0x140] sm:$0xf]
      %v1136 = vld [vmem:[%s387 + $0x144] sm:$0xf]
      %v1137 = vld [vmem:[%s387 + $0x148] sm:$0xf]
      %v1138 = vld [vmem:[%s387 + $0x14c] sm:$0xf]
      %v1139 = vld [vmem:[%s387 + $0x150] sm:$0xf]
      %v1140 = vld [vmem:[%s387 + $0x154] sm:$0xf]
      %v1141 = vld [vmem:[%s387 + $0x158] sm:$0xf]
      %v1142 = vld [vmem:[%s387 + $0x15c] sm:$0xf]
      %v1143 = vld [vmem:[%s387 + $0x160] sm:$0xf]
      %v1144 = vld [vmem:[%s387 + $0x164] sm:$0xf]
      %v1145 = vld [vmem:[%s387 + $0x168] sm:$0xf]
      %v1146 = vld [vmem:[%s387 + $0x16c] sm:$0xf]
      %v1147 = vld [vmem:[%s387 + $0x170] sm:$0xf]
      %v1148 = vld [vmem:[%s387 + $0x174] sm:$0xf]
      %v1149 = vld [vmem:[%s387 + $0x178] sm:$0xf]
      %v1150 = vld [vmem:[%s387 + $0x17c] sm:$0xf]
      %v1151 = vld [vmem:[%s387 + $0x180] sm:$0xf]
      %v1152 = vld [vmem:[%s387 + $0x184] sm:$0xf]
      %v1153 = vld [vmem:[%s387 + $0x188] sm:$0xf]
      %v1154 = vld [vmem:[%s387 + $0x18c] sm:$0xf]
      %v1155 = vld [vmem:[%s387 + $0x190] sm:$0xf]
      %v1156 = vld [vmem:[%s387 + $0x194] sm:$0xf]
      %v1157 = vld [vmem:[%s387 + $0x198] sm:$0xf]
      %v1158 = vld [vmem:[%s387 + $0x19c] sm:$0xf]
      %v1159 = vld [vmem:[%s387 + $0x1a0] sm:$0xf]
      %v1160 = vld [vmem:[%s387 + $0x1a4] sm:$0xf]
      %v1161 = vld [vmem:[%s387 + $0x1a8] sm:$0xf]
      %v1162 = vld [vmem:[%s387 + $0x1ac] sm:$0xf]
      %v1163 = vld [vmem:[%s387 + $0x1b0] sm:$0xf]
      %v1164 = vld [vmem:[%s387 + $0x1b4] sm:$0xf]
      %v1165 = vld [vmem:[%s387 + $0x1b8] sm:$0xf]
      %v1166 = vld [vmem:[%s387 + $0x1bc] sm:$0xf]
      %v1167 = vld [vmem:[%s387 + $0x1c0] sm:$0xf]
      %v1168 = vld [vmem:[%s387 + $0x1c4] sm:$0xf]
      %v1169 = vld [vmem:[%s387 + $0x1c8] sm:$0xf]
      %v1170 = vld [vmem:[%s387 + $0x1cc] sm:$0xf]
      %v1171 = vld [vmem:[%s387 + $0x1d0] sm:$0xf]
      %v1172 = vld [vmem:[%s387 + $0x1d4] sm:$0xf]
      %v1173 = vld [vmem:[%s387 + $0x1d8] sm:$0xf]
      %v1174 = vld [vmem:[%s387 + $0x1dc] sm:$0xf]
      %v1175 = vld [vmem:[%s387 + $0x1e0] sm:$0xf]
      %v1176 = vld [vmem:[%s387 + $0x1e4] sm:$0xf]
      %v1177 = vld [vmem:[%s387 + $0x1e8] sm:$0xf]
      %v1178 = vld [vmem:[%s387 + $0x1ec] sm:$0xf]
      %v1179 = vld [vmem:[%s387 + $0x1f0] sm:$0xf]
      %v1180 = vld [vmem:[%s387 + $0x1f4] sm:$0xf]
      %v1181 = vld [vmem:[%s387 + $0x1f8] sm:$0xf]
      %v1182 = vld [vmem:[%s387 + $0x1fc] sm:$0xf]
      %v1183 = vlaneseq
      %v1184 = vshrl.u32 %v1183, 7
      %v1185 = vsub.s32 2, %v1184
      %v1186 = vrot.slane %v402, %v1185
      %v1315 = vunpack.c.l.b16 %v1055
      %v1316 = vunpack.c.l.b16 %v1056
      %v1317 = vunpack.c.l.b16 %v1057
      %v1318 = vunpack.c.l.b16 %v1058
      %v1319 = vunpack.c.l.b16 %v1059
      %v1320 = vunpack.c.l.b16 %v1060
      %v1321 = vunpack.c.l.b16 %v1061
      %v1322 = vunpack.c.l.b16 %v1062
      %v1323 = vunpack.c.l.b16 %v1063
      %v1324 = vunpack.c.l.b16 %v1064
      %v1325 = vunpack.c.l.b16 %v1065
      %v1326 = vunpack.c.l.b16 %v1066
      %v1327 = vunpack.c.l.b16 %v1067
      %v1328 = vunpack.c.l.b16 %v1068
      %v1329 = vunpack.c.l.b16 %v1069
      %v1330 = vunpack.c.l.b16 %v1070
      %v1331 = vunpack.c.l.b16 %v1071
      %v1332 = vunpack.c.l.b16 %v1072
      %v1333 = vunpack.c.l.b16 %v1073
      %v1334 = vunpack.c.l.b16 %v1074
      %v1335 = vunpack.c.l.b16 %v1075
      %v1336 = vunpack.c.l.b16 %v1076
      %v1337 = vunpack.c.l.b16 %v1077
      %v1338 = vunpack.c.l.b16 %v1078
      %v1339 = vunpack.c.l.b16 %v1079
      %v1340 = vunpack.c.l.b16 %v1080
      %v1341 = vunpack.c.l.b16 %v1081
      %v1342 = vunpack.c.l.b16 %v1082
      %v1343 = vunpack.c.l.b16 %v1083
      %v1344 = vunpack.c.l.b16 %v1084
      %v1345 = vunpack.c.l.b16 %v1085
      %v1346 = vunpack.c.l.b16 %v1086
      %v1347 = vunpack.c.l.b16 %v1087
      %v1348 = vunpack.c.l.b16 %v1088
      %v1349 = vunpack.c.l.b16 %v1089
      %v1350 = vunpack.c.l.b16 %v1090
      %v1351 = vunpack.c.l.b16 %v1091
      %v1352 = vunpack.c.l.b16 %v1092
      %v1353 = vunpack.c.l.b16 %v1093
      %v1354 = vunpack.c.l.b16 %v1094
      %v1355 = vunpack.c.l.b16 %v1095
      %v1356 = vunpack.c.l.b16 %v1096
      %v1357 = vunpack.c.l.b16 %v1097
      %v1358 = vunpack.c.l.b16 %v1098
      %v1359 = vunpack.c.l.b16 %v1099
      %v1360 = vunpack.c.l.b16 %v1100
      %v1361 = vunpack.c.l.b16 %v1101
      %v1362 = vunpack.c.l.b16 %v1102
      %v1363 = vunpack.c.l.b16 %v1103
      %v1364 = vunpack.c.l.b16 %v1104
      %v1365 = vunpack.c.l.b16 %v1105
      %v1366 = vunpack.c.l.b16 %v1106
      %v1367 = vunpack.c.l.b16 %v1107
      %v1368 = vunpack.c.l.b16 %v1108
      %v1369 = vunpack.c.l.b16 %v1109
      %v1370 = vunpack.c.l.b16 %v1110
      %v1371 = vunpack.c.l.b16 %v1111
      %v1372 = vunpack.c.l.b16 %v1112
      %v1373 = vunpack.c.l.b16 %v1113
      %v1374 = vunpack.c.l.b16 %v1114
      %v1375 = vunpack.c.l.b16 %v1115
      %v1376 = vunpack.c.l.b16 %v1116
      %v1377 = vunpack.c.l.b16 %v1117
      %v1378 = vunpack.c.l.b16 %v1118
      %v1379 = vunpack.c.l.b16 %v1119
      %v1380 = vunpack.c.l.b16 %v1120
      %v1381 = vunpack.c.l.b16 %v1121
      %v1382 = vunpack.c.l.b16 %v1122
      %v1383 = vunpack.c.l.b16 %v1123
      %v1384 = vunpack.c.l.b16 %v1124
      %v1385 = vunpack.c.l.b16 %v1125
      %v1386 = vunpack.c.l.b16 %v1126
      %v1387 = vunpack.c.l.b16 %v1127
      %v1388 = vunpack.c.l.b16 %v1128
      %v1389 = vunpack.c.l.b16 %v1129
      %v1390 = vunpack.c.l.b16 %v1130
      %v1391 = vunpack.c.l.b16 %v1131
      %v1392 = vunpack.c.l.b16 %v1132
      %v1393 = vunpack.c.l.b16 %v1133
      %v1394 = vunpack.c.l.b16 %v1134
      %v1395 = vunpack.c.l.b16 %v1135
      %v1396 = vunpack.c.l.b16 %v1136
      %v1397 = vunpack.c.l.b16 %v1137
      %v1398 = vunpack.c.l.b16 %v1138
      %v1399 = vunpack.c.l.b16 %v1139
      %v1400 = vunpack.c.l.b16 %v1140
      %v1401 = vunpack.c.l.b16 %v1141
      %v1402 = vunpack.c.l.b16 %v1142
      %v1403 = vunpack.c.l.b16 %v1143
      %v1404 = vunpack.c.l.b16 %v1144
      %v1405 = vunpack.c.l.b16 %v1145
      %v1406 = vunpack.c.l.b16 %v1146
      %v1407 = vunpack.c.l.b16 %v1147
      %v1408 = vunpack.c.l.b16 %v1148
      %v1409 = vunpack.c.l.b16 %v1149
      %v1410 = vunpack.c.l.b16 %v1150
      %v1411 = vunpack.c.l.b16 %v1151
      %v1412 = vunpack.c.l.b16 %v1152
      %v1413 = vunpack.c.l.b16 %v1153
      %v1414 = vunpack.c.l.b16 %v1154
      %v1415 = vunpack.c.l.b16 %v1155
      %v1416 = vunpack.c.l.b16 %v1156
      %v1417 = vunpack.c.l.b16 %v1157
      %v1418 = vunpack.c.l.b16 %v1158
      %v1419 = vunpack.c.l.b16 %v1159
      %v1420 = vunpack.c.l.b16 %v1160
      %v1421 = vunpack.c.l.b16 %v1161
      %v1422 = vunpack.c.l.b16 %v1162
      %v1423 = vunpack.c.l.b16 %v1163
      %v1424 = vunpack.c.l.b16 %v1164
      %v1425 = vunpack.c.l.b16 %v1165
      %v1426 = vunpack.c.l.b16 %v1166
      %v1427 = vunpack.c.l.b16 %v1167
      %v1428 = vunpack.c.l.b16 %v1168
      %v1429 = vunpack.c.l.b16 %v1169
      %v1430 = vunpack.c.l.b16 %v1170
      %v1431 = vunpack.c.l.b16 %v1171
      %v1432 = vunpack.c.l.b16 %v1172
      %v1433 = vunpack.c.l.b16 %v1173
      %v1434 = vunpack.c.l.b16 %v1174
      %v1435 = vunpack.c.l.b16 %v1175
      %v1436 = vunpack.c.l.b16 %v1176
      %v1437 = vunpack.c.l.b16 %v1177
      %v1438 = vunpack.c.l.b16 %v1178
      %v1439 = vunpack.c.l.b16 %v1179
      %v1440 = vunpack.c.l.b16 %v1180
      %v1441 = vunpack.c.l.b16 %v1181
      %v1442 = vunpack.c.l.b16 %v1182
      %v1443 = vpack.c.b16 %v1316, %v1315
      %v1444 = vpack.c.b16 %v1318, %v1317
      %v1445 = vpack.c.b16 %v1320, %v1319
      %v1446 = vpack.c.b16 %v1322, %v1321
      %v1447 = vpack.c.b16 %v1324, %v1323
      %v1448 = vpack.c.b16 %v1326, %v1325
      %v1449 = vpack.c.b16 %v1328, %v1327
      %v1450 = vpack.c.b16 %v1330, %v1329
      %v1451 = vpack.c.b16 %v1332, %v1331
      %v1452 = vpack.c.b16 %v1334, %v1333
      %v1453 = vpack.c.b16 %v1336, %v1335
      %v1454 = vpack.c.b16 %v1338, %v1337
      %v1455 = vpack.c.b16 %v1340, %v1339
      %v1456 = vpack.c.b16 %v1342, %v1341
      %v1457 = vpack.c.b16 %v1344, %v1343
      %v1458 = vpack.c.b16 %v1346, %v1345
      %v1459 = vpack.c.b16 %v1348, %v1347
      %v1460 = vpack.c.b16 %v1350, %v1349
      %v1461 = vpack.c.b16 %v1352, %v1351
      %v1462 = vpack.c.b16 %v1354, %v1353
      %v1463 = vpack.c.b16 %v1356, %v1355
      %v1464 = vpack.c.b16 %v1358, %v1357
      %v1465 = vpack.c.b16 %v1360, %v1359
      %v1466 = vpack.c.b16 %v1362, %v1361
      %v1467 = vpack.c.b16 %v1364, %v1363
      %v1468 = vpack.c.b16 %v1366, %v1365
      %v1469 = vpack.c.b16 %v1368, %v1367
      %v1470 = vpack.c.b16 %v1370, %v1369
      %v1471 = vpack.c.b16 %v1372, %v1371
      %v1472 = vpack.c.b16 %v1374, %v1373
      %v1473 = vpack.c.b16 %v1376, %v1375
      %v1474 = vpack.c.b16 %v1378, %v1377
      %v1475 = vpack.c.b16 %v1380, %v1379
      %v1476 = vpack.c.b16 %v1382, %v1381
      %v1477 = vpack.c.b16 %v1384, %v1383
      %v1478 = vpack.c.b16 %v1386, %v1385
      %v1479 = vpack.c.b16 %v1388, %v1387
      %v1480 = vpack.c.b16 %v1390, %v1389
      %v1481 = vpack.c.b16 %v1392, %v1391
      %v1482 = vpack.c.b16 %v1394, %v1393
      %v1483 = vpack.c.b16 %v1396, %v1395
      %v1484 = vpack.c.b16 %v1398, %v1397
      %v1485 = vpack.c.b16 %v1400, %v1399
      %v1486 = vpack.c.b16 %v1402, %v1401
      %v1487 = vpack.c.b16 %v1404, %v1403
      %v1488 = vpack.c.b16 %v1406, %v1405
      %v1489 = vpack.c.b16 %v1408, %v1407
      %v1490 = vpack.c.b16 %v1410, %v1409
      %v1491 = vpack.c.b16 %v1412, %v1411
      %v1492 = vpack.c.b16 %v1414, %v1413
      %v1493 = vpack.c.b16 %v1416, %v1415
      %v1494 = vpack.c.b16 %v1418, %v1417
      %v1495 = vpack.c.b16 %v1420, %v1419
      %v1496 = vpack.c.b16 %v1422, %v1421
      %v1497 = vpack.c.b16 %v1424, %v1423
      %v1498 = vpack.c.b16 %v1426, %v1425
      %v1499 = vpack.c.b16 %v1428, %v1427
      %v1500 = vpack.c.b16 %v1430, %v1429
      %v1501 = vpack.c.b16 %v1432, %v1431
      %v1502 = vpack.c.b16 %v1434, %v1433
      %v1503 = vpack.c.b16 %v1436, %v1435
      %v1504 = vpack.c.b16 %v1438, %v1437
      %v1505 = vpack.c.b16 %v1440, %v1439
      %v1506 = vpack.c.b16 %v1442, %v1441
      %1571 = vmatprep.subr.bf16.mxu0 0
      %1572 = vmatpush1.bf16.msra.mxu0 %v1443
      %1573 = vmatprep.subr.bf16.mxu0 0
      %1574 = vmatpush1.bf16.msra.mxu0 %v1444
      %1575 = vmatprep.subr.bf16.mxu0 0
      %1576 = vmatpush1.bf16.msra.mxu0 %v1445
      %1577 = vmatprep.subr.bf16.mxu0 0
      %1578 = vmatpush1.bf16.msra.mxu0 %v1446
      %1579 = vmatprep.subr.bf16.mxu0 0
      %1580 = vmatpush1.bf16.msra.mxu0 %v1447
      %1581 = vmatprep.subr.bf16.mxu0 0
      %1582 = vmatpush1.bf16.msra.mxu0 %v1448
      %1583 = vmatprep.subr.bf16.mxu0 0
      %1584 = vmatpush1.bf16.msra.mxu0 %v1449
      %1585 = vmatprep.subr.bf16.mxu0 0
      %1586 = vmatpush1.bf16.msra.mxu0 %v1450
      %1587 = vmatprep.subr.bf16.mxu0 0
      %1588 = vmatpush1.bf16.msra.mxu0 %v1451
      %1589 = vmatprep.subr.bf16.mxu0 0
      %1590 = vmatpush1.bf16.msra.mxu0 %v1452
      %1591 = vmatprep.subr.bf16.mxu0 0
      %1592 = vmatpush1.bf16.msra.mxu0 %v1453
      %1593 = vmatprep.subr.bf16.mxu0 0
      %1594 = vmatpush1.bf16.msra.mxu0 %v1454
      %1595 = vmatprep.subr.bf16.mxu0 0
      %1596 = vmatpush1.bf16.msra.mxu0 %v1455
      %1597 = vmatprep.subr.bf16.mxu0 0
      %1598 = vmatpush1.bf16.msra.mxu0 %v1456
      %1599 = vmatprep.subr.bf16.mxu0 0
      %1600 = vmatpush1.bf16.msra.mxu0 %v1457
      %1601 = vmatprep.subr.bf16.mxu0 0
      %1602 = vmatpush1.bf16.msra.mxu0 %v1458
      %1603 = vmatprep.mubr.bf16.mxu0 %v1048
      %1604 = vmatmul.mubr.bf16.gmra.mrb[0].mxu0 %v1047
      %v1605 = vpop.f32.mrb[0].mxu0
      %v1606 = vadd.f32 %v1186, %v1605
      %v1607 = vpop.f32.mrb[0].mxu0
      %v1608 = vpop.f32.mrb[0].mxu0
      %v1609 = vpop.f32.mrb[0].mxu0
      %1610 = vdwg.mxu0
      %1611 = vmatprep.subr.bf16.mxu0 0
      %1612 = vmatpush1.bf16.msra.mxu0 %v1459
      %1613 = vmatprep.subr.bf16.mxu0 0
      %1614 = vmatpush1.bf16.msra.mxu0 %v1460
      %1615 = vmatprep.subr.bf16.mxu0 0
      %1616 = vmatpush1.bf16.msra.mxu0 %v1461
      %1617 = vmatprep.subr.bf16.mxu0 0
      %1618 = vmatpush1.bf16.msra.mxu0 %v1462
      %1619 = vmatprep.subr.bf16.mxu0 0
      %1620 = vmatpush1.bf16.msra.mxu0 %v1463
      %1621 = vmatprep.subr.bf16.mxu0 0
      %1622 = vmatpush1.bf16.msra.mxu0 %v1464
      %1623 = vmatprep.subr.bf16.mxu0 0
      %1624 = vmatpush1.bf16.msra.mxu0 %v1465
      %1625 = vmatprep.subr.bf16.mxu0 0
      %1626 = vmatpush1.bf16.msra.mxu0 %v1466
      %1627 = vmatprep.subr.bf16.mxu0 0
      %1628 = vmatpush1.bf16.msra.mxu0 %v1467
      %1629 = vmatprep.subr.bf16.mxu0 0
      %1630 = vmatpush1.bf16.msra.mxu0 %v1468
      %1631 = vmatprep.subr.bf16.mxu0 0
      %1632 = vmatpush1.bf16.msra.mxu0 %v1469
      %1633 = vmatprep.subr.bf16.mxu0 0
      %1634 = vmatpush1.bf16.msra.mxu0 %v1470
      %1635 = vmatprep.subr.bf16.mxu0 0
      %1636 = vmatpush1.bf16.msra.mxu0 %v1471
      %1637 = vmatprep.subr.bf16.mxu0 0
      %1638 = vmatpush1.bf16.msra.mxu0 %v1472
      %1639 = vmatprep.subr.bf16.mxu0 0
      %1640 = vmatpush1.bf16.msra.mxu0 %v1473
      %1641 = vmatprep.subr.bf16.mxu0 0
      %1642 = vmatpush1.bf16.msra.mxu0 %v1474
      %1643 = vmatprep.mubr.bf16.mxu0 %v1050
      %1644 = vmatmul.mubr.bf16.gmra.mrb[0].mxu0 %v1049
      %v1645 = vpop.f32.mrb[0].mxu0
      %v1646 = vadd.f32 %v1606, %v1645
      %v1647 = vpop.f32.mrb[0].mxu0
      %v1648 = vpop.f32.mrb[0].mxu0
      %v1649 = vpop.f32.mrb[0].mxu0
      %1650 = vdwg.mxu0
      %1651 = vmatprep.subr.bf16.mxu0 0
      %1652 = vmatpush1.bf16.msra.mxu0 %v1475
      %1653 = vmatprep.subr.bf16.mxu0 0
      %1654 = vmatpush1.bf16.msra.mxu0 %v1476
      %1655 = vmatprep.subr.bf16.mxu0 0
      %1656 = vmatpush1.bf16.msra.mxu0 %v1477
      %1657 = vmatprep.subr.bf16.mxu0 0
      %1658 = vmatpush1.bf16.msra.mxu0 %v1478
      %1659 = vmatprep.subr.bf16.mxu0 0
      %1660 = vmatpush1.bf16.msra.mxu0 %v1479
      %1661 = vmatprep.subr.bf16.mxu0 0
      %1662 = vmatpush1.bf16.msra.mxu0 %v1480
      %1663 = vmatprep.subr.bf16.mxu0 0
      %1664 = vmatpush1.bf16.msra.mxu0 %v1481
      %1665 = vmatprep.subr.bf16.mxu0 0
      %1666 = vmatpush1.bf16.msra.mxu0 %v1482
      %1667 = vmatprep.subr.bf16.mxu0 0
      %1668 = vmatpush1.bf16.msra.mxu0 %v1483
      %1669 = vmatprep.subr.bf16.mxu0 0
      %1670 = vmatpush1.bf16.msra.mxu0 %v1484
      %1671 = vmatprep.subr.bf16.mxu0 0
      %1672 = vmatpush1.bf16.msra.mxu0 %v1485
      %1673 = vmatprep.subr.bf16.mxu0 0
      %1674 = vmatpush1.bf16.msra.mxu0 %v1486
      %1675 = vmatprep.subr.bf16.mxu0 0
      %1676 = vmatpush1.bf16.msra.mxu0 %v1487
      %1677 = vmatprep.subr.bf16.mxu0 0
      %1678 = vmatpush1.bf16.msra.mxu0 %v1488
      %1679 = vmatprep.subr.bf16.mxu0 0
      %1680 = vmatpush1.bf16.msra.mxu0 %v1489
      %1681 = vmatprep.subr.bf16.mxu0 0
      %1682 = vmatpush1.bf16.msra.mxu0 %v1490
      %1683 = vmatprep.mubr.bf16.mxu0 %v1052
      %1684 = vmatmul.mubr.bf16.gmra.mrb[0].mxu0 %v1051
      %v1685 = vpop.f32.mrb[0].mxu0
      %v1686 = vadd.f32 %v1646, %v1685
      %v1687 = vpop.f32.mrb[0].mxu0
      %v1688 = vpop.f32.mrb[0].mxu0
      %v1689 = vpop.f32.mrb[0].mxu0
      %1690 = vdwg.mxu0
      %1691 = vmatprep.subr.bf16.mxu0 0
      %1692 = vmatpush1.bf16.msra.mxu0 %v1491
      %1693 = vmatprep.subr.bf16.mxu0 0
      %1694 = vmatpush1.bf16.msra.mxu0 %v1492
      %1695 = vmatprep.subr.bf16.mxu0 0
      %1696 = vmatpush1.bf16.msra.mxu0 %v1493
      %1697 = vmatprep.subr.bf16.mxu0 0
      %1698 = vmatpush1.bf16.msra.mxu0 %v1494
      %1699 = vmatprep.subr.bf16.mxu0 0
      %1700 = vmatpush1.bf16.msra.mxu0 %v1495
      %1701 = vmatprep.subr.bf16.mxu0 0
      %1702 = vmatpush1.bf16.msra.mxu0 %v1496
      %1703 = vmatprep.subr.bf16.mxu0 0
      %1704 = vmatpush1.bf16.msra.mxu0 %v1497
      %1705 = vmatprep.subr.bf16.mxu0 0
      %1706 = vmatpush1.bf16.msra.mxu0 %v1498
      %1707 = vmatprep.subr.bf16.mxu0 0
      %1708 = vmatpush1.bf16.msra.mxu0 %v1499
      %1709 = vmatprep.subr.bf16.mxu0 0
      %1710 = vmatpush1.bf16.msra.mxu0 %v1500
      %1711 = vmatprep.subr.bf16.mxu0 0
      %1712 = vmatpush1.bf16.msra.mxu0 %v1501
      %1713 = vmatprep.subr.bf16.mxu0 0
      %1714 = vmatpush1.bf16.msra.mxu0 %v1502
      %1715 = vmatprep.subr.bf16.mxu0 0
      %1716 = vmatpush1.bf16.msra.mxu0 %v1503
      %1717 = vmatprep.subr.bf16.mxu0 0
      %1718 = vmatpush1.bf16.msra.mxu0 %v1504
      %1719 = vmatprep.subr.bf16.mxu0 0
      %1720 = vmatpush1.bf16.msra.mxu0 %v1505
      %1721 = vmatprep.subr.bf16.mxu0 0
      %1722 = vmatpush1.bf16.msra.mxu0 %v1506
      %1723 = vmatprep.mubr.bf16.mxu0 %v1054
      %1724 = vmatmul.mubr.bf16.gmra.mrb[0].mxu0 %v1053
      %v1725 = vpop.f32.mrb[0].mxu0
      %v1726 = vadd.f32 %v1686, %v1725
      %v1727 = vpop.f32.mrb[0].mxu0
      %v1728 = vpop.f32.mrb[0].mxu0
      %v1729 = vpop.f32.mrb[0].mxu0
      %1730 = vdwg.mxu0
      %v1731 = vmax.f32 %v1726, 0.0
      %v1732 = vpack.c.bf16 %v1731, %v1731
      %v1733 = vld [vmem:[%s392] sm:$0xf]
      %v1734 = vld [vmem:[%s392 + $0x4] sm:$0xf]
      %v1735 = vld [vmem:[%s392 + $0x8] sm:$0xf]
      %v1736 = vld [vmem:[%s392 + $0xc] sm:$0xf]
      %v1737 = vld [vmem:[%s392 + $0x10] sm:$0xf]
      %v1738 = vld [vmem:[%s392 + $0x14] sm:$0xf]
      %v1739 = vld [vmem:[%s392 + $0x18] sm:$0xf]
      %v1740 = vld [vmem:[%s392 + $0x1c] sm:$0xf]
      %v1741 = vld [vmem:[%s392 + $0x20] sm:$0xf]
      %v1742 = vld [vmem:[%s392 + $0x24] sm:$0xf]
      %v1743 = vld [vmem:[%s392 + $0x28] sm:$0xf]
      %v1744 = vld [vmem:[%s392 + $0x2c] sm:$0xf]
      %v1745 = vld [vmem:[%s392 + $0x30] sm:$0xf]
      %v1746 = vld [vmem:[%s392 + $0x34] sm:$0xf]
      %v1747 = vld [vmem:[%s392 + $0x38] sm:$0xf]
      %v1748 = vld [vmem:[%s392 + $0x3c] sm:$0xf]
      %v1749 = vlaneseq
      %v1750 = vshrl.u32 %v1749, 7
      %v1751 = vsub.s32 3, %v1750
      %v1752 = vrot.slane %v402, %v1751
      %v1769 = vunpack.c.l.b16 %v1733
      %v1770 = vunpack.c.l.b16 %v1734
      %v1771 = vunpack.c.l.b16 %v1735
      %v1772 = vunpack.c.l.b16 %v1736
      %v1773 = vunpack.c.l.b16 %v1737
      %v1774 = vunpack.c.l.b16 %v1738
      %v1775 = vunpack.c.l.b16 %v1739
      %v1776 = vunpack.c.l.b16 %v1740
      %v1777 = vunpack.c.l.b16 %v1741
      %v1778 = vunpack.c.l.b16 %v1742
      %v1779 = vunpack.c.l.b16 %v1743
      %v1780 = vunpack.c.l.b16 %v1744
      %v1781 = vunpack.c.l.b16 %v1745
      %v1782 = vunpack.c.l.b16 %v1746
      %v1783 = vunpack.c.l.b16 %v1747
      %v1784 = vunpack.c.l.b16 %v1748
      %v1785 = vpack.c.b16 %v1770, %v1769
      %v1786 = vpack.c.b16 %v1772, %v1771
      %v1787 = vpack.c.b16 %v1774, %v1773
      %v1788 = vpack.c.b16 %v1776, %v1775
      %v1789 = vpack.c.b16 %v1778, %v1777
      %v1790 = vpack.c.b16 %v1780, %v1779
      %v1791 = vpack.c.b16 %v1782, %v1781
      %v1792 = vpack.c.b16 %v1784, %v1783
      %1801 = vmatprep.subr.bf16.mxu0 0
      %1802 = vmatpush1.bf16.msra.mxu0 %v1785
      %1803 = vmatprep.subr.bf16.mxu0 0
      %1804 = vmatpush1.bf16.msra.mxu0 %v1786
      %1805 = vmatprep.subr.bf16.mxu0 0
      %1806 = vmatpush1.bf16.msra.mxu0 %v1787
      %1807 = vmatprep.subr.bf16.mxu0 0
      %1808 = vmatpush1.bf16.msra.mxu0 %v1788
      %1809 = vmatprep.subr.bf16.mxu0 0
      %1810 = vmatpush1.bf16.msra.mxu0 %v1789
      %1811 = vmatprep.subr.bf16.mxu0 0
      %1812 = vmatpush1.bf16.msra.mxu0 %v1790
      %1813 = vmatprep.subr.bf16.mxu0 0
      %1814 = vmatpush1.bf16.msra.mxu0 %v1791
      %1815 = vmatprep.subr.bf16.mxu0 0
      %1816 = vmatpush1.bf16.msra.mxu0 %v1792
      %1817 = vmatprep.subr.bf16.mxu0 0
      %1818 = vmatpush1.bf16.msra.mxu0 0
      %1819 = vmatprep.subr.bf16.mxu0 0
      %1820 = vmatpush1.bf16.msra.mxu0 0
      %1821 = vmatprep.subr.bf16.mxu0 0
      %1822 = vmatpush1.bf16.msra.mxu0 0
      %1823 = vmatprep.subr.bf16.mxu0 0
      %1824 = vmatpush1.bf16.msra.mxu0 0
      %1825 = vmatprep.subr.bf16.mxu0 0
      %1826 = vmatpush1.bf16.msra.mxu0 0
      %1827 = vmatprep.subr.bf16.mxu0 0
      %1828 = vmatpush1.bf16.msra.mxu0 0
      %1829 = vmatprep.subr.bf16.mxu0 0
      %1830 = vmatpush1.bf16.msra.mxu0 0
      %1831 = vmatprep.subr.bf16.mxu0 0
      %1832 = vmatpush1.bf16.msra.mxu0 0
      %1833 = vmatprep.mubr.bf16.mxu0 0
      %1834 = vmatmul.mubr.bf16.gmra.mrb[0].mxu0 %v1732
      %v1835 = vpop.f32.mrb[0].mxu0
      %v1836 = vadd.f32 %v1752, %v1835
      %v1837 = vpop.f32.mrb[0].mxu0
      %v1838 = vpop.f32.mrb[0].mxu0
      %v1839 = vpop.f32.mrb[0].mxu0
      %1840 = vdwg.mxu0
      %p1841 = scmp.eq.s32.totalorder %s19, 0
      // Predicated region
      $region53: #{evaluate.1} parent=51 // pred_check
        %p1842 = pneg %p1841
      $region54: #{evaluate.1} parent=51 // pred_check_branch
        %1844 = sbr.rel (%p1842) target = $region56
      $region55: #{evaluate.1} parent=51 // pred_region
        %v1845 = vld [vmem:[%s7] sm:$0xff]
        %v1846 = vld [vmem:[%s6] sm:$0xff]
        %v1847 = vsub.f32 %v1846, %v1836
        %v1848 = vmul.f32 %v1847, %v1847
        %v1849 = vlaneseq
        %v1850 = vshrl.u32 %v1849, 7
        %v1851 = vsub.s32 0, %v1850
        %v1852 = vrot.slane %v1845, %v1851
        %v1853 = vmul.f32 %v1848, %v1852
        %v1854 = vlaneseq
        %v1855 = vshrl.u32 %v1854, 7
        %v1856 = vsub.s32 1, %v1855
        %v1857 = vrot.slane %v1845, %v1856
        %v1858 = vadd.f32 %v1853, %v1857
        %1859 = vadd.xlane.f32.xlu0 %v1858
        %v1860 = vpop.xlane.xlu0 %1859
        %v1861 = vlaneseq
        %v1862 = vshrl.u32 %v1861, 7
        %v1863 = vsub.s32 2, %v1862
        %v1864 = vrot.slane %v1845, %v1863
        %v1865 = vmul.f32 %v1846, %v1864
        %v1866 = vlaneseq
        %v1867 = vshrl.u32 %v1866, 7
        %v1868 = vsub.s32 3, %v1867
        %v1869 = vrot.slane %v1845, %v1868
        %v1870 = vadd.f32 %v1865, %v1869
        %v1871 = vlaneseq
        %v1872 = vshrl.u32 %v1871, 7
        %v1873 = vsub.s32 4, %v1872
        %v1874 = vrot.slane %v1845, %v1873
        %v1875 = vmul.f32 %v1860, %v1874
        %v1876 = vadd.f32 %v1870, %v1875
        %1877 = vst [vmem:[%s400] sm:$0xff] %v1876
      $region56: #{evaluate.1} parent=51 // pred_fallthru
        _
      %p1878 = scmp.eq.s32.totalorder %s19, 1
      // Predicated region
      $region57: #{evaluate.1} parent=51 // pred_check
        %p1879 = pneg %p1878
      $region58: #{evaluate.1} parent=51 // pred_check_branch
        %1881 = sbr.rel (%p1879) target = $region60
      $region59: #{evaluate.1} parent=51 // pred_region
        %1882 = vst [vmem:[%s400] sm:$0xff] %v1836
      $region60: #{evaluate.1} parent=51 // pred_fallthru
        _
      %p1883 = scmp.lt.s32.totalorder %s19, 1
      %s1884 = scalar_select %p1883, %s19, 1
      %s1885 = smul.addr %s1884, 8
      %s1886 = scalar_lea.vmem %s8, %s1885
      // Predicated region
      $region61: #{evaluate.1} parent=51 // pred_check
        %p1887 = pneg %p235
      $region62: #{evaluate.1} parent=51 // pred_check_branch
        %1889 = sbr.rel (%p1887) target = $region64
      $region63: #{evaluate.1} parent=51 // pred_region
        _
      $region64: #{evaluate.1} parent=51 // pred_fallthru
        _
    $region52: #{evaluate.1} parent=5 // pred_fallthru
      _
    %p1890 = scmp.le.s32.totalorder 2, %s14
    // Predicated region
    $region65: #{evaluate.1} parent=5 // pred_check
      %p1891 = pneg %p1890
    $region66: #{evaluate.1} parent=5 // pred_check_branch
      %1893 = sbr.rel (%p1891) target = $region68
    $region67: #{evaluate.1} parent=5 // pred_region
      %s1894 = ssub.s32 %s14, 2
      // Predicated region
      $region69: #{evaluate.1} parent=67 // pred_check
        %p1895 = pneg %p241
      $region70: #{evaluate.1} parent=67 // pred_check_branch
        %1897 = sbr.rel (%p1895) target = $region72
      $region71: #{evaluate.1} parent=67 // pred_region
        %p1898 = scmp.lt.s32.totalorder %s20, 1
        %s1899 = scalar_select %p1898, %s20, 1
        %s1900 = smul.addr %s1899, 8
        %s1901 = scalar_lea.vmem %s8, %s1900
      $region72: #{evaluate.1} parent=67 // pred_fallthru
        _
    $region68: #{evaluate.1} parent=5 // pred_fallthru
      _
  $region6: #{evaluate.1} parent=0 // loop_footer
    %s18 = sadd.s32 1, %s14
  $region7: #{evaluate.1} parent=0 // loop_footer_branch
    %13 = sbr.rel target = $region3
  $region8: #{evaluate.1} parent=0 // loop_exit
    _

</llo_original>
